<compile_context>
chip_gen: v7x
topology: tpu7x:2x2x1
jax: 0.10.0
libtpu: 0.0.40
codegen_flags: <defaults>
</compile_context>

<pallas_src>
from functools import partial

import jax
import jax.numpy as jnp
from jax import lax
from jax.experimental import pallas as pl
from jax.experimental.pallas import tpu as pltpu

# ---- Model config (from the PyTorch module) ---------------------------------
INPUT_SIZE = 1
HIDDEN_SIZE = 50
NUM_LAYERS = 3
OUTPUT_SIZE = 1

# ---- Padded (lane / sublane aligned) sizes ----------------------------------
HP = 128          # hidden dim padded to full lane width
OP = 128          # output dim padded to full lane width (lane-dense store)


# ---- Pallas kernel: one grid step per RNN layer ------------------------------
def rnn_kernel(x_ref, wih_ref, whh_ref, bias_ref, wfc_ref, bfc_ref,
               out_ref, seq_buf, *, bp):
    """One invocation per layer; per-layer weights are pipelined by Pallas.

    x_ref   : (S*Bp, Hp)   time-major padded input (only lane 0 is real data)
    wih_ref : (1, Hp, Hp)  this layer's pre-transposed W_ih (layer-0: row 0 only)
    whh_ref : (1, Hp, Hp)  this layer's pre-transposed W_hh
    bias_ref: (1, 1, Hp)   this layer's b_ih + b_hh (pre-summed)
    wfc_ref : (Hp, Op)     pre-transposed FC weight (padded)
    bfc_ref : (1, Op)      FC bias (padded)
    out_ref : (S*Bp, Op)   written only on the last layer
    seq_buf : (S*Bp, Hp)   persistent VMEM scratch carrying the layer sequence
    """
    l = pl.program_id(0)
    last = pl.num_programs(0) - 1
    sb, hp = seq_buf.shape
    seq_len = sb // bp

    wih_t = wih_ref[0]          # (Hp, Hp)
    whh_t = whh_ref[0]          # (Hp, Hp)
    b = bias_ref[0]             # (1, Hp)

    # Hoisted input projection for the whole sequence (off the serial chain).
    @pl.when(l == 0)
    def _():
        # input_size == 1: the projection is an outer product -> pure VPU
        # broadcast; no x copy into seq_buf and no MXU op needed.
        seq_buf[...] = x_ref[:, 0:1] * wih_t[0:1, :] + b

    @pl.when(l != 0)
    def _():
        seq_buf[...] = (
            jnp.dot(seq_buf[...], wih_t, preferred_element_type=jnp.float32) + b)

    # Hold the projected sequence as values (8 vregs): the time loop below has
    # no per-step VMEM loads; only h @ W_hh^T + add + relu are on the chain.
    proj = seq_buf[...]

    h = jnp.zeros((bp, hp), dtype=jnp.float32)       # zero initial hidden state
    for t in range(seq_len):                         # static: fully unrolled (S=8)
        pre = proj[t * bp:(t + 1) * bp, :] + jnp.dot(
            h, whh_t, preferred_element_type=jnp.float32)
        h = jnp.maximum(pre, 0.0)                    # nonlinearity='relu'
        seq_buf[pl.ds(t * bp, bp), :] = h            # store is off the chain

    # FC head over every timestep at once: one matmul, one lane-dense store.
    @pl.when(l == last)
    def _():
        out_ref[...] = (
            jnp.dot(seq_buf[...], wfc_ref[...],
                    preferred_element_type=jnp.float32) + bfc_ref[...])


# ---- Wrapper -----------------------------------------------------------------
def rnn_forward(x, packed):
    """x: (batch, seq, input_size) f32 -> (batch, seq, output_size) f32."""
    wih_t, whh_t, bias, wfc_t, bfc = packed
    B, S, I = x.shape
    L = wih_t.shape[0]
    Hp, Op = HP, OP
    Bp = ((B + 7) // 8) * 8                          # sublane-align batch

    # Time-major, zero-padded to (S, Bp, Hp), flattened to (S*Bp, Hp).
    x_sb = jnp.transpose(x, (1, 0, 2)).astype(jnp.float32)     # (S, B, I)
    x_pad = jnp.zeros((S, Bp, Hp), jnp.float32).at[:, :B, :I].set(x_sb)
    x_flat = x_pad.reshape(S * Bp, Hp)

    out_flat = pl.pallas_call(
        partial(rnn_kernel, bp=Bp),
        out_shape=jax.ShapeDtypeStruct((S * Bp, Op), jnp.float32),
        grid_spec=pltpu.PrefetchScalarGridSpec(
            num_scalar_prefetch=0,
            grid=(L,),                                           # one step / layer
            in_specs=[
                pl.BlockSpec((S * Bp, Hp), lambda l: (0, 0)),    # x (layer 0 only)
                pl.BlockSpec((1, Hp, Hp), lambda l: (l, 0, 0)),  # W_ih^T[l]
                pl.BlockSpec((1, Hp, Hp), lambda l: (l, 0, 0)),  # W_hh^T[l]
                pl.BlockSpec((1, 1, Hp), lambda l: (l, 0, 0)),   # (b_ih+b_hh)[l]
                pl.BlockSpec((Hp, Op), lambda l: (0, 0)),        # W_fc^T
                pl.BlockSpec((1, Op), lambda l: (0, 0)),         # b_fc
            ],
            out_specs=pl.BlockSpec((S * Bp, Op), lambda l: (0, 0)),
            scratch_shapes=[pltpu.VMEM((S * Bp, Hp), jnp.float32)],
        ),
        compiler_params=pltpu.CompilerParams(
            dimension_semantics=("arbitrary",)),                 # layers are serial
    )(x_flat, wih_t, whh_t, bias, wfc_t, bfc)

    out = out_flat.reshape(S, Bp, Op)[:, :B, :OUTPUT_SIZE]       # (S, B, O)
    return jnp.transpose(out, (1, 0, 2))                         # (B, S, O)


# ---- Parameter init (PyTorch-style U(-1/sqrt(H), 1/sqrt(H)), raw layout) -----
def init_params(key):
    H, I, L, O = HIDDEN_SIZE, INPUT_SIZE, NUM_LAYERS, OUTPUT_SIZE
    k = 1.0 / (H ** 0.5)
    keys = jax.random.split(key, 4 * L + 2)

    wih, whh, bih, bhh = [], [], [], []
    for l in range(L):
        in_dim = I if l == 0 else H
        wih.append(jax.random.uniform(keys[4 * l + 0], (H, in_dim),
                                      minval=-k, maxval=k, dtype=jnp.float32))
        whh.append(jax.random.uniform(keys[4 * l + 1], (H, H),
                                      minval=-k, maxval=k, dtype=jnp.float32))
        bih.append(jax.random.uniform(keys[4 * l + 2], (H,),
                                      minval=-k, maxval=k, dtype=jnp.float32))
        bhh.append(jax.random.uniform(keys[4 * l + 3], (H,),
                                      minval=-k, maxval=k, dtype=jnp.float32))
    wfc = jax.random.uniform(keys[-2], (O, H), minval=-k, maxval=k,
                             dtype=jnp.float32)
    bfc = jax.random.uniform(keys[-1], (O,), minval=-k, maxval=k,
                             dtype=jnp.float32)
    return wih, whh, bih, bhh, wfc, bfc


# ---- Host-side packing: pre-transpose, pre-sum biases, pad to lane width -----
def pack_params(raw):
    wih, whh, bih, bhh, wfc, bfc = raw
    H, L, O = HIDDEN_SIZE, NUM_LAYERS, OUTPUT_SIZE
    Hp, Op = HP, OP

    wih_t = jnp.zeros((L, Hp, Hp), jnp.float32)
    whh_t = jnp.zeros((L, Hp, Hp), jnp.float32)
    bias = jnp.zeros((L, 1, Hp), jnp.float32)
    for l in range(L):
        in_dim = wih[l].shape[1]
        wih_t = wih_t.at[l, :in_dim, :H].set(wih[l].T)
        whh_t = whh_t.at[l, :H, :H].set(whh[l].T)
        bias = bias.at[l, 0, :H].set(bih[l] + bhh[l])

    wfc_t = jnp.zeros((Hp, Op), jnp.float32).at[:H, :O].set(wfc.T)
    bfc_p = jnp.zeros((1, Op), jnp.float32).at[0, :O].set(bfc)
    return wih_t, whh_t, bias, wfc_t, bfc_p


# ---- Pure-JAX reference for verification ------------------------------------
def rnn_ref(x, raw):
    wih, whh, bih, bhh, wfc, bfc = raw
    B, S, I = x.shape
    H = HIDDEN_SIZE
    seq = jnp.transpose(x, (1, 0, 2))                 # (S, B, I)
    for l in range(NUM_LAYERS):
        def step(h, x_t, l=l):
            h_new = jnp.maximum(x_t @ wih[l].T + h @ whh[l].T + bih[l] + bhh[l],
                                0.0)
            return h_new, h_new
        _, seq = lax.scan(step, jnp.zeros((B, H), jnp.float32), seq)
    out = seq @ wfc.T + bfc                           # (S, B, O)
    return jnp.transpose(out, (1, 0, 2))              # (B, S, O)


if __name__ == "__main__":
    key = jax.random.PRNGKey(0)
    pkey, xkey = jax.random.split(key)

    raw_params = init_params(pkey)
    packed = pack_params(raw_params)

    # Small shapes consistent with the module: batch=2, seq=8, input_size=1.
    x = jax.random.normal(xkey, (2, 8, INPUT_SIZE), dtype=jnp.float32)

    out = jax.block_until_ready(rnn_forward(x, packed))
    ref = jax.block_until_ready(rnn_ref(x, raw_params))

    assert out.shape == (2, 8, OUTPUT_SIZE)
    assert jnp.allclose(out, ref, atol=1e-4, rtol=1e-4), \
        "mismatch vs pure-JAX reference"

    print("KERNEL_OK")
</pallas_src>

<mosaic_0001>
module attributes {stable_mosaic.version = 11 : i64} {
  func.func @rnn_kernel(%arg0: i32, %arg1: memref<64x128xf32, #tpu.memory_space<vmem>>, %arg2: memref<1x128x128xf32, #tpu.memory_space<vmem>>, %arg3: memref<1x128x128xf32, #tpu.memory_space<vmem>>, %arg4: memref<1x1x128xf32, #tpu.memory_space<vmem>>, %arg5: memref<128x128xf32, #tpu.memory_space<vmem>>, %arg6: memref<1x128xf32, #tpu.memory_space<vmem>>, %arg7: memref<64x128xf32, #tpu.memory_space<vmem>>, %arg8: memref<64x128xf32, #tpu.memory_space<vmem>>) attributes {dimension_semantics = [#tpu.dimension_semantics<arbitrary>], iteration_bounds = array<i64: 3>, scalar_prefetch = 0 : i64, scratch_operands = 1 : i64, tpu.core_type = #tpu.core_type<tc>, window_params = [{pipeline_mode = #tpu.pipeline_mode<synchronous>, transform_indices = @transform_0, window_bounds = array<i64: 64, 128>}, {transform_indices = @transform_1, window_bounds = array<i64: 1, 128, 128>}, {transform_indices = @transform_2, window_bounds = array<i64: 1, 128, 128>}, {transform_indices = @transform_3, window_bounds = array<i64: 1, 1, 128>}, {pipeline_mode = #tpu.pipeline_mode<synchronous>, transform_indices = @transform_4, window_bounds = array<i64: 128, 128>}, {pipeline_mode = #tpu.pipeline_mode<synchronous>, transform_indices = @transform_5, window_bounds = array<i64: 1, 128>}, {pipeline_mode = #tpu.pipeline_mode<synchronous>, transform_indices = @transform_6, window_bounds = array<i64: 64, 128>}]} {
    %c0 = arith.constant 0 : index
    %c0_0 = arith.constant 0 : index
    %c0_1 = arith.constant 0 : index
    %0 = vector.load %arg2[%c0, %c0_0, %c0_1] : memref<1x128x128xf32, #tpu.memory_space<vmem>>, vector<1x128x128xf32>
    %1 = vector.shape_cast %0 : vector<1x128x128xf32> to vector<128x128xf32>
    %c0_2 = arith.constant 0 : index
    %c0_3 = arith.constant 0 : index
    %c0_4 = arith.constant 0 : index
    %2 = vector.load %arg3[%c0_2, %c0_3, %c0_4] : memref<1x128x128xf32, #tpu.memory_space<vmem>>, vector<1x128x128xf32>
    %3 = vector.shape_cast %2 : vector<1x128x128xf32> to vector<128x128xf32>
    %c0_5 = arith.constant 0 : index
    %c0_6 = arith.constant 0 : index
    %c0_7 = arith.constant 0 : index
    %4 = vector.load %arg4[%c0_5, %c0_6, %c0_7] : memref<1x1x128xf32, #tpu.memory_space<vmem>>, vector<1x1x128xf32>
    %5 = vector.shape_cast %4 : vector<1x1x128xf32> to vector<1x128xf32>
    %c0_i32 = arith.constant 0 : i32
    %6 = arith.cmpi eq, %arg0, %c0_i32 : i32
    %7 = arith.extui %6 : i1 to i32
    %c0_i32_8 = arith.constant 0 : i32
    %8 = arith.cmpi ne, %7, %c0_i32_8 : i32
    scf.if %8 {
      %c0_39 = arith.constant 0 : index
      %c0_40 = arith.constant 0 : index
      %65 = vector.load %arg1[%c0_39, %c0_40] : memref<64x128xf32, #tpu.memory_space<vmem>>, vector<64x1xf32>
      %66 = vector.extract_strided_slice %1 {offsets = [0, 0], sizes = [1, 128], strides = [1, 1]} : vector<128x128xf32> to vector<1x128xf32>
      %67 = vector.broadcast %65 : vector<64x1xf32> to vector<64x128xf32>
      %68 = vector.broadcast %66 : vector<1x128xf32> to vector<64x128xf32>
      %69 = arith.mulf %67, %68 : vector<64x128xf32>
      %70 = vector.broadcast %5 : vector<1x128xf32> to vector<64x128xf32>
      %71 = arith.addf %69, %70 : vector<64x128xf32>
      %c0_41 = arith.constant 0 : index
      %c0_42 = arith.constant 0 : index
      %72 = vector.load %arg8[%c0_41, %c0_42] : memref<64x128xf32, #tpu.memory_space<vmem>>, vector<64x128xf32>
      tpu.vector_store %arg8[%c0_41, %c0_42], %71 {strides = array<i32>} : memref<64x128xf32, #tpu.memory_space<vmem>>, vector<64x128xf32>,
    } else {
    }
    %c0_i32_9 = arith.constant 0 : i32
    %9 = arith.cmpi ne, %arg0, %c0_i32_9 : i32
    %10 = arith.extui %9 : i1 to i32
    %c0_i32_10 = arith.constant 0 : i32
    %11 = arith.cmpi ne, %10, %c0_i32_10 : i32
    scf.if %11 {
      %c0_39 = arith.constant 0 : index
      %c0_40 = arith.constant 0 : index
      %65 = vector.load %arg8[%c0_39, %c0_40] : memref<64x128xf32, #tpu.memory_space<vmem>>, vector<64x128xf32>
      %cst_41 = arith.constant dense<0.000000e+00> : vector<64x128xf32>
      %66 = tpu.matmul %65, %1, %cst_41 {dimension_numbers = #tpu.dot_dimension_numbers<[1], [0], [0], [1], [0, 0, 1, 1], [], []>} : vector<64x128xf32>, vector<128x128xf32>, vector<64x128xf32> -> vector<64x128xf32>
      %67 = vector.broadcast %5 : vector<1x128xf32> to vector<64x128xf32>
      %68 = arith.addf %66, %67 : vector<64x128xf32>
      %c0_42 = arith.constant 0 : index
      %c0_43 = arith.constant 0 : index
      %69 = vector.load %arg8[%c0_42, %c0_43] : memref<64x128xf32, #tpu.memory_space<vmem>>, vector<64x128xf32>
      tpu.vector_store %arg8[%c0_42, %c0_43], %68 {strides = array<i32>} : memref<64x128xf32, #tpu.memory_space<vmem>>, vector<64x128xf32>,
    } else {
    }
    %c0_11 = arith.constant 0 : index
    %c0_12 = arith.constant 0 : index
    %12 = vector.load %arg8[%c0_11, %c0_12] : memref<64x128xf32, #tpu.memory_space<vmem>>, vector<64x128xf32>
    %cst = arith.constant 0.000000e+00 : f32
    %13 = vector.broadcast %cst : f32 to vector<8x128xf32>
    %14 = vector.extract_strided_slice %12 {offsets = [0, 0], sizes = [8, 128], strides = [1, 1]} : vector<64x128xf32> to vector<8x128xf32>
    %cst_13 = arith.constant dense<0.000000e+00> : vector<8x128xf32>
    %15 = tpu.matmul %13, %3, %cst_13 {dimension_numbers = #tpu.dot_dimension_numbers<[1], [0], [0], [1], [0, 0, 1, 1], [], []>} : vector<8x128xf32>, vector<128x128xf32>, vector<8x128xf32> -> vector<8x128xf32>
    %16 = arith.addf %14, %15 : vector<8x128xf32>
    %cst_14 = arith.constant 0.000000e+00 : f32
    %17 = vector.broadcast %cst_14 : f32 to vector<8x128xf32>
    %18 = arith.maximumf %16, %17 : vector<8x128xf32>
    %c0_15 = arith.constant 0 : index
    %c0_16 = arith.constant 0 : index
    %19 = vector.load %arg8[%c0_15, %c0_16] : memref<64x128xf32, #tpu.memory_space<vmem>>, vector<8x128xf32>
    tpu.vector_store %arg8[%c0_15, %c0_16], %18 {strides = array<i32>} : memref<64x128xf32, #tpu.memory_space<vmem>>, vector<8x128xf32>,
    %20 = vector.extract_strided_slice %12 {offsets = [8, 0], sizes = [8, 128], strides = [1, 1]} : vector<64x128xf32> to vector<8x128xf32>
    %cst_17 = arith.constant dense<0.000000e+00> : vector<8x128xf32>
    %21 = tpu.matmul %18, %3, %cst_17 {dimension_numbers = #tpu.dot_dimension_numbers<[1], [0], [0], [1], [0, 0, 1, 1], [], []>} : vector<8x128xf32>, vector<128x128xf32>, vector<8x128xf32> -> vector<8x128xf32>
    %22 = arith.addf %20, %21 : vector<8x128xf32>
    %cst_18 = arith.constant 0.000000e+00 : f32
    %23 = vector.broadcast %cst_18 : f32 to vector<8x128xf32>
    %24 = arith.maximumf %22, %23 : vector<8x128xf32>
    %c8 = arith.constant 8 : index
    %c0_19 = arith.constant 0 : index
    %25 = vector.load %arg8[%c8, %c0_19] : memref<64x128xf32, #tpu.memory_space<vmem>>, vector<8x128xf32>
    tpu.vector_store %arg8[%c8, %c0_19], %24 {strides = array<i32>} : memref<64x128xf32, #tpu.memory_space<vmem>>, vector<8x128xf32>,
    %26 = vector.extract_strided_slice %12 {offsets = [16, 0], sizes = [8, 128], strides = [1, 1]} : vector<64x128xf32> to vector<8x128xf32>
    %cst_20 = arith.constant dense<0.000000e+00> : vector<8x128xf32>
    %27 = tpu.matmul %24, %3, %cst_20 {dimension_numbers = #tpu.dot_dimension_numbers<[1], [0], [0], [1], [0, 0, 1, 1], [], []>} : vector<8x128xf32>, vector<128x128xf32>, vector<8x128xf32> -> vector<8x128xf32>
    %28 = arith.addf %26, %27 : vector<8x128xf32>
    %cst_21 = arith.constant 0.000000e+00 : f32
    %29 = vector.broadcast %cst_21 : f32 to vector<8x128xf32>
    %30 = arith.maximumf %28, %29 : vector<8x128xf32>
    %c16 = arith.constant 16 : index
    %c0_22 = arith.constant 0 : index
    %31 = vector.load %arg8[%c16, %c0_22] : memref<64x128xf32, #tpu.memory_space<vmem>>, vector<8x128xf32>
    tpu.vector_store %arg8[%c16, %c0_22], %30 {strides = array<i32>} : memref<64x128xf32, #tpu.memory_space<vmem>>, vector<8x128xf32>,
    %32 = vector.extract_strided_slice %12 {offsets = [24, 0], sizes = [8, 128], strides = [1, 1]} : vector<64x128xf32> to vector<8x128xf32>
    %cst_23 = arith.constant dense<0.000000e+00> : vector<8x128xf32>
    %33 = tpu.matmul %30, %3, %cst_23 {dimension_numbers = #tpu.dot_dimension_numbers<[1], [0], [0], [1], [0, 0, 1, 1], [], []>} : vector<8x128xf32>, vector<128x128xf32>, vector<8x128xf32> -> vector<8x128xf32>
    %34 = arith.addf %32, %33 : vector<8x128xf32>
    %cst_24 = arith.constant 0.000000e+00 : f32
    %35 = vector.broadcast %cst_24 : f32 to vector<8x128xf32>
    %36 = arith.maximumf %34, %35 : vector<8x128xf32>
    %c24 = arith.constant 24 : index
    %c0_25 = arith.constant 0 : index
    %37 = vector.load %arg8[%c24, %c0_25] : memref<64x128xf32, #tpu.memory_space<vmem>>, vector<8x128xf32>
    tpu.vector_store %arg8[%c24, %c0_25], %36 {strides = array<i32>} : memref<64x128xf32, #tpu.memory_space<vmem>>, vector<8x128xf32>,
    %38 = vector.extract_strided_slice %12 {offsets = [32, 0], sizes = [8, 128], strides = [1, 1]} : vector<64x128xf32> to vector<8x128xf32>
    %cst_26 = arith.constant dense<0.000000e+00> : vector<8x128xf32>
    %39 = tpu.matmul %36, %3, %cst_26 {dimension_numbers = #tpu.dot_dimension_numbers<[1], [0], [0], [1], [0, 0, 1, 1], [], []>} : vector<8x128xf32>, vector<128x128xf32>, vector<8x128xf32> -> vector<8x128xf32>
    %40 = arith.addf %38, %39 : vector<8x128xf32>
    %cst_27 = arith.constant 0.000000e+00 : f32
    %41 = vector.broadcast %cst_27 : f32 to vector<8x128xf32>
    %42 = arith.maximumf %40, %41 : vector<8x128xf32>
    %c32 = arith.constant 32 : index
    %c0_28 = arith.constant 0 : index
    %43 = vector.load %arg8[%c32, %c0_28] : memref<64x128xf32, #tpu.memory_space<vmem>>, vector<8x128xf32>
    tpu.vector_store %arg8[%c32, %c0_28], %42 {strides = array<i32>} : memref<64x128xf32, #tpu.memory_space<vmem>>, vector<8x128xf32>,
    %44 = vector.extract_strided_slice %12 {offsets = [40, 0], sizes = [8, 128], strides = [1, 1]} : vector<64x128xf32> to vector<8x128xf32>
    %cst_29 = arith.constant dense<0.000000e+00> : vector<8x128xf32>
    %45 = tpu.matmul %42, %3, %cst_29 {dimension_numbers = #tpu.dot_dimension_numbers<[1], [0], [0], [1], [0, 0, 1, 1], [], []>} : vector<8x128xf32>, vector<128x128xf32>, vector<8x128xf32> -> vector<8x128xf32>
    %46 = arith.addf %44, %45 : vector<8x128xf32>
    %cst_30 = arith.constant 0.000000e+00 : f32
    %47 = vector.broadcast %cst_30 : f32 to vector<8x128xf32>
    %48 = arith.maximumf %46, %47 : vector<8x128xf32>
    %c40 = arith.constant 40 : index
    %c0_31 = arith.constant 0 : index
    %49 = vector.load %arg8[%c40, %c0_31] : memref<64x128xf32, #tpu.memory_space<vmem>>, vector<8x128xf32>
    tpu.vector_store %arg8[%c40, %c0_31], %48 {strides = array<i32>} : memref<64x128xf32, #tpu.memory_space<vmem>>, vector<8x128xf32>,
    %50 = vector.extract_strided_slice %12 {offsets = [48, 0], sizes = [8, 128], strides = [1, 1]} : vector<64x128xf32> to vector<8x128xf32>
    %cst_32 = arith.constant dense<0.000000e+00> : vector<8x128xf32>
    %51 = tpu.matmul %48, %3, %cst_32 {dimension_numbers = #tpu.dot_dimension_numbers<[1], [0], [0], [1], [0, 0, 1, 1], [], []>} : vector<8x128xf32>, vector<128x128xf32>, vector<8x128xf32> -> vector<8x128xf32>
    %52 = arith.addf %50, %51 : vector<8x128xf32>
    %cst_33 = arith.constant 0.000000e+00 : f32
    %53 = vector.broadcast %cst_33 : f32 to vector<8x128xf32>
    %54 = arith.maximumf %52, %53 : vector<8x128xf32>
    %c48 = arith.constant 48 : index
    %c0_34 = arith.constant 0 : index
    %55 = vector.load %arg8[%c48, %c0_34] : memref<64x128xf32, #tpu.memory_space<vmem>>, vector<8x128xf32>
    tpu.vector_store %arg8[%c48, %c0_34], %54 {strides = array<i32>} : memref<64x128xf32, #tpu.memory_space<vmem>>, vector<8x128xf32>,
    %56 = vector.extract_strided_slice %12 {offsets = [56, 0], sizes = [8, 128], strides = [1, 1]} : vector<64x128xf32> to vector<8x128xf32>
    %cst_35 = arith.constant dense<0.000000e+00> : vector<8x128xf32>
    %57 = tpu.matmul %54, %3, %cst_35 {dimension_numbers = #tpu.dot_dimension_numbers<[1], [0], [0], [1], [0, 0, 1, 1], [], []>} : vector<8x128xf32>, vector<128x128xf32>, vector<8x128xf32> -> vector<8x128xf32>
    %58 = arith.addf %56, %57 : vector<8x128xf32>
    %cst_36 = arith.constant 0.000000e+00 : f32
    %59 = vector.broadcast %cst_36 : f32 to vector<8x128xf32>
    %60 = arith.maximumf %58, %59 : vector<8x128xf32>
    %c56 = arith.constant 56 : index
    %c0_37 = arith.constant 0 : index
    %61 = vector.load %arg8[%c56, %c0_37] : memref<64x128xf32, #tpu.memory_space<vmem>>, vector<8x128xf32>
    tpu.vector_store %arg8[%c56, %c0_37], %60 {strides = array<i32>} : memref<64x128xf32, #tpu.memory_space<vmem>>, vector<8x128xf32>,
    %c2_i32 = arith.constant 2 : i32
    %62 = arith.cmpi eq, %arg0, %c2_i32 : i32
    %63 = arith.extui %62 : i1 to i32
    %c0_i32_38 = arith.constant 0 : i32
    %64 = arith.cmpi ne, %63, %c0_i32_38 : i32
    scf.if %64 {
      %c0_39 = arith.constant 0 : index
      %c0_40 = arith.constant 0 : index
      %65 = vector.load %arg8[%c0_39, %c0_40] : memref<64x128xf32, #tpu.memory_space<vmem>>, vector<64x128xf32>
      %c0_41 = arith.constant 0 : index
      %c0_42 = arith.constant 0 : index
      %66 = vector.load %arg5[%c0_41, %c0_42] : memref<128x128xf32, #tpu.memory_space<vmem>>, vector<128x128xf32>
      %cst_43 = arith.constant dense<0.000000e+00> : vector<64x128xf32>
      %67 = tpu.matmul %65, %66, %cst_43 {dimension_numbers = #tpu.dot_dimension_numbers<[1], [0], [0], [1], [0, 0, 1, 1], [], []>} : vector<64x128xf32>, vector<128x128xf32>, vector<64x128xf32> -> vector<64x128xf32>
      %c0_44 = arith.constant 0 : index
      %c0_45 = arith.constant 0 : index
      %68 = vector.load %arg6[%c0_44, %c0_45] : memref<1x128xf32, #tpu.memory_space<vmem>>, vector<1x128xf32>
      %69 = vector.broadcast %68 : vector<1x128xf32> to vector<64x128xf32>
      %70 = arith.addf %67, %69 : vector<64x128xf32>
      %c0_46 = arith.constant 0 : index
      %c0_47 = arith.constant 0 : index
      %71 = vector.load %arg7[%c0_46, %c0_47] : memref<64x128xf32, #tpu.memory_space<vmem>>, vector<64x128xf32>
      tpu.vector_store %arg7[%c0_46, %c0_47], %70 {strides = array<i32>} : memref<64x128xf32, #tpu.memory_space<vmem>>, vector<64x128xf32>,
    } else {
    }
    return
  }
  func.func @transform_0(%arg0: i32) -> (i32, i32) {
    %c0_i32 = arith.constant 0 : i32
    %c0_i32_0 = arith.constant 0 : i32
    %c0_i32_1 = arith.constant 0 : i32
    return %c0_i32, %c0_i32_0 : i32, i32
  }
  func.func @transform_1(%arg0: i32) -> (i32, i32, i32) {
    %c0_i32 = arith.constant 0 : i32
    %c0_i32_0 = arith.constant 0 : i32
    %c0_i32_1 = arith.constant 0 : i32
    return %arg0, %c0_i32, %c0_i32_0 : i32, i32, i32
  }
  func.func @transform_2(%arg0: i32) -> (i32, i32, i32) {
    %c0_i32 = arith.constant 0 : i32
    %c0_i32_0 = arith.constant 0 : i32
    %c0_i32_1 = arith.constant 0 : i32
    return %arg0, %c0_i32, %c0_i32_0 : i32, i32, i32
  }
  func.func @transform_3(%arg0: i32) -> (i32, i32, i32) {
    %c0_i32 = arith.constant 0 : i32
    %c0_i32_0 = arith.constant 0 : i32
    %c0_i32_1 = arith.constant 0 : i32
    return %arg0, %c0_i32, %c0_i32_0 : i32, i32, i32
  }
  func.func @transform_4(%arg0: i32) -> (i32, i32) {
    %c0_i32 = arith.constant 0 : i32
    %c0_i32_0 = arith.constant 0 : i32
    %c0_i32_1 = arith.constant 0 : i32
    return %c0_i32, %c0_i32_0 : i32, i32
  }
  func.func @transform_5(%arg0: i32) -> (i32, i32) {
    %c0_i32 = arith.constant 0 : i32
    %c0_i32_0 = arith.constant 0 : i32
    %c0_i32_1 = arith.constant 0 : i32
    return %c0_i32, %c0_i32_0 : i32, i32
  }
  func.func @transform_6(%arg0: i32) -> (i32, i32) {
    %c0_i32 = arith.constant 0 : i32
    %c0_i32_0 = arith.constant 0 : i32
    %c0_i32_1 = arith.constant 0 : i32
    return %c0_i32, %c0_i32_0 : i32, i32
  }
}

</mosaic_0001>

<llo_original>
// kernel: tpu_custom_call.1
$region0: #{tpu_custom_call.1}
  #allocation0 [shape = 'u32[]', space=smem, size = 0x4, offset = 0x4, fixed_abs, tag = 'smem constant byte address 0x4 - core index']
  #allocation1 [shape = 'u32[144,128]{1,0:T(1,128)}', space=vmem, size = 0x12000, scoped, tag = 'internal scratch']
  #allocation2 [shape = 'f32[64,128]{1,0:T(8,128)}', space=vmem, size = 0x8000, scoped, tag = 'scratch operand']
  %s0 = inlined_call_operand.hbm [shape: f32[64,128], index: 0, kind: input, shape index: {}]
  %s1 = inlined_call_operand.hbm [shape: f32[3,128,128], index: 1, kind: input, shape index: {}]
  %s2 = inlined_call_operand.hbm [shape: f32[3,128,128], index: 2, kind: input, shape index: {}]
  %s3 = inlined_call_operand.vmem [shape: f32[3,1,128], index: 3, kind: input, shape index: {}]
  %s4 = inlined_call_operand.hbm [shape: f32[128,128], index: 4, kind: input, shape index: {}]
  %s5 = inlined_call_operand.vmem [shape: f32[1,128], index: 5, kind: input, shape index: {}]
  %s6 = inlined_call_operand.hbm [shape: f32[64,128], index: 6, kind: output, shape index: {}]
  %s7 = sld [smem:[#allocation0]]
  $region85: #{tpu_custom_call.1} parent=0
    _
  %s9 = ssub.s32 1, %s7
  %s10 = scalar_select 0, %s9, %s7
  $region1: #{tpu_custom_call.1} parent=0
    #allocation3 [shape = 'u8[32768]{0}', space=vmem, size = 0x8000, scoped, tag = 'input window, operand 0, single buffered']
    #allocation4 [shape = 's32[2]{0}', space=sflag, size = 0x8, scoped, tag = 'scoped memory for tpu_custom_call.1']
    #allocation5 [shape = 's32[2]{0}', space=sflag, size = 0x8, scoped, tag = 'scoped memory for tpu_custom_call.1']
    #allocation6 [shape = 'u8[131072]{0}', space=vmem, size = 0x20000, scoped, tag = 'input window, operand 1']
    #allocation7 [shape = 's32[2]{0}', space=sflag, size = 0x8, scoped, tag = 'scoped memory for tpu_custom_call.1']
    #allocation8 [shape = 'u8[131072]{0}', space=vmem, size = 0x20000, scoped, tag = 'input window, operand 2']
    #allocation9 [shape = 'u8[65536]{0}', space=vmem, size = 0x10000, scoped, tag = 'input window, operand 4, single buffered']
    #allocation10 [shape = 's32[1]{0}', space=sflag, size = 0x4, scoped, tag = 'scoped memory for tpu_custom_call.1']
    #allocation11 [shape = 'u8[32768]{0}', space=vmem, size = 0x8000, scoped, tag = 'output window, operand 0, single buffered']
    %11 = vsyncpa [#allocation4], 0
    %12 = vsyncpa [#allocation7], 0
    %s13 = scalar_lea.sflag [#allocation7], 1
    %14 = vsyncpa %s13, 0
    %15 = vsyncpa [#allocation10], 0
    %16 = vsyncpa [#allocation5], 0
    loop: start=0, step=1, limit=5
    $region2: #{tpu_custom_call.1} parent=1 // loop_pre_header
      _
    $region3: #{tpu_custom_call.1} parent=1 // loop_header
      %s18 = sphi 0, %s22
      %p19 = scmp.ge.s32.totalorder %s18, 5
      %s26 = sphi 0, %s26
      %s28 = sphi 0, %s26
      %s29 = sphi 0, %s28
      %s43 = sphi 0, %s29
      %s49 = sphi 0, %s51
      %s52 = sphi 0, %s49
      %s53 = sphi 0, %s52
      %s69 = sphi 0, %s53
      %s75 = sphi 0, %s77
      %s78 = sphi 0, %s75
      %s79 = sphi 0, %s78
      %s95 = sphi 0, %s79
      %s101 = sphi 0, %s103
      %s104 = sphi 0, %s101
      %s105 = sphi 0, %s104
      %s121 = sphi 0, %s105
      %s125 = sphi 0, %s125
      %s127 = sphi 0, %s125
      %s128 = sphi 0, %s127
      %s142 = sphi 0, %s128
      %s146 = sphi 0, %s146
      %s148 = sphi 0, %s146
      %s149 = sphi 0, %s148
      %s163 = sphi 0, %s149
      %s167 = sphi 0, %s167
      %s169 = sphi 0, %s167
      %s170 = sphi 0, %s169
      %s184 = sphi 0, %s170
    $region4: #{tpu_custom_call.1} parent=1 // loop_header_branch
      %21 = sbr.rel (%p19) target = $region8
    $region5: #{tpu_custom_call.1} parent=1 // loop_body
      %s23 = ssub.s32 %s18, 1
      %s24 = ssub.s32 %s18, 2
      %s25 = sadd.s32 %s18, 1
      %s27 = sadd.s32 %s26, 1
      %p30 = scmp.eq.s32.totalorder %s18, 2
      %p31 = scmp.ne.s32.totalorder %s26, %s28
      %p32 = scmp.eq.s32.totalorder %s18, 0
      %p33 = por %p31, %p32
      %p34 = scmp.ne.s32.totalorder %s26, %s28
      %p35 = scmp.eq.s32.totalorder %s23, 2
      %p36 = por %p34, %p35
      %p37 = scmp.ne.s32.totalorder %s28, %s29
      %p38 = scmp.eq.s32.totalorder %s23, 0
      %p39 = por %p37, %p38
      %p40 = scmp.ne.s32.totalorder %s28, %s29
      %p41 = scmp.eq.s32.totalorder %s24, 2
      %p42 = por %p40, %p41
      %p44 = scmp.ne.s32.totalorder %s29, %s43
      %p45 = scmp.eq.s32.totalorder %s24, 0
      %p46 = por %p44, %p45
      %s47 = ssub.s32 %s18, %s25
      %p48 = scmp.eq.s32.totalorder %s47, 0
      %s50 = sadd.s32 %s49, 1
      %s51 = scalar_select %p48, %s49, %s50
      %p54 = pneg %p48
      %p55 = scmp.eq.s32.totalorder %s18, 2
      %p56 = por %p54, %p55
      %p57 = scmp.ne.s32.totalorder %s49, %s52
      %p58 = scmp.eq.s32.totalorder %s18, 0
      %p59 = por %p57, %p58
      %p60 = scmp.ne.s32.totalorder %s49, %s52
      %p61 = scmp.eq.s32.totalorder %s23, 2
      %p62 = por %p60, %p61
      %p63 = scmp.ne.s32.totalorder %s52, %s53
      %p64 = scmp.eq.s32.totalorder %s23, 0
      %p65 = por %p63, %p64
      %p66 = scmp.ne.s32.totalorder %s52, %s53
      %p67 = scmp.eq.s32.totalorder %s24, 2
      %p68 = por %p66, %p67
      %p70 = scmp.ne.s32.totalorder %s53, %s69
      %p71 = scmp.eq.s32.totalorder %s24, 0
      %p72 = por %p70, %p71
      %s73 = ssub.s32 %s18, %s25
      %p74 = scmp.eq.s32.totalorder %s73, 0
      %s76 = sadd.s32 %s75, 1
      %s77 = scalar_select %p74, %s75, %s76
      %p80 = pneg %p74
      %p81 = scmp.eq.s32.totalorder %s18, 2
      %p82 = por %p80, %p81
      %p83 = scmp.ne.s32.totalorder %s75, %s78
      %p84 = scmp.eq.s32.totalorder %s18, 0
      %p85 = por %p83, %p84
      %p86 = scmp.ne.s32.totalorder %s75, %s78
      %p87 = scmp.eq.s32.totalorder %s23, 2
      %p88 = por %p86, %p87
      %p89 = scmp.ne.s32.totalorder %s78, %s79
      %p90 = scmp.eq.s32.totalorder %s23, 0
      %p91 = por %p89, %p90
      %p92 = scmp.ne.s32.totalorder %s78, %s79
      %p93 = scmp.eq.s32.totalorder %s24, 2
      %p94 = por %p92, %p93
      %p96 = scmp.ne.s32.totalorder %s79, %s95
      %p97 = scmp.eq.s32.totalorder %s24, 0
      %p98 = por %p96, %p97
      %s99 = ssub.s32 %s18, %s25
      %p100 = scmp.eq.s32.totalorder %s99, 0
      %s102 = sadd.s32 %s101, 1
      %s103 = scalar_select %p100, %s101, %s102
      %p106 = pneg %p100
      %p107 = scmp.eq.s32.totalorder %s18, 2
      %p108 = por %p106, %p107
      %p109 = scmp.ne.s32.totalorder %s101, %s104
      %p110 = scmp.eq.s32.totalorder %s18, 0
      %p111 = por %p109, %p110
      %p112 = scmp.ne.s32.totalorder %s101, %s104
      %p113 = scmp.eq.s32.totalorder %s23, 2
      %p114 = por %p112, %p113
      %p115 = scmp.ne.s32.totalorder %s104, %s105
      %p116 = scmp.eq.s32.totalorder %s23, 0
      %p117 = por %p115, %p116
      %p118 = scmp.ne.s32.totalorder %s104, %s105
      %p119 = scmp.eq.s32.totalorder %s24, 2
      %p120 = por %p118, %p119
      %p122 = scmp.ne.s32.totalorder %s105, %s121
      %p123 = scmp.eq.s32.totalorder %s24, 0
      %p124 = por %p122, %p123
      %s126 = sadd.s32 %s125, 1
      %p129 = scmp.eq.s32.totalorder %s18, 2
      %p130 = scmp.ne.s32.totalorder %s125, %s127
      %p131 = scmp.eq.s32.totalorder %s18, 0
      %p132 = por %p130, %p131
      %p133 = scmp.ne.s32.totalorder %s125, %s127
      %p134 = scmp.eq.s32.totalorder %s23, 2
      %p135 = por %p133, %p134
      %p136 = scmp.ne.s32.totalorder %s127, %s128
      %p137 = scmp.eq.s32.totalorder %s23, 0
      %p138 = por %p136, %p137
      %p139 = scmp.ne.s32.totalorder %s127, %s128
      %p140 = scmp.eq.s32.totalorder %s24, 2
      %p141 = por %p139, %p140
      %p143 = scmp.ne.s32.totalorder %s128, %s142
      %p144 = scmp.eq.s32.totalorder %s24, 0
      %p145 = por %p143, %p144
      %s147 = sadd.s32 %s146, 1
      %p150 = scmp.eq.s32.totalorder %s18, 2
      %p151 = scmp.ne.s32.totalorder %s146, %s148
      %p152 = scmp.eq.s32.totalorder %s18, 0
      %p153 = por %p151, %p152
      %p154 = scmp.ne.s32.totalorder %s146, %s148
      %p155 = scmp.eq.s32.totalorder %s23, 2
      %p156 = por %p154, %p155
      %p157 = scmp.ne.s32.totalorder %s148, %s149
      %p158 = scmp.eq.s32.totalorder %s23, 0
      %p159 = por %p157, %p158
      %p160 = scmp.ne.s32.totalorder %s148, %s149
      %p161 = scmp.eq.s32.totalorder %s24, 2
      %p162 = por %p160, %p161
      %p164 = scmp.ne.s32.totalorder %s149, %s163
      %p165 = scmp.eq.s32.totalorder %s24, 0
      %p166 = por %p164, %p165
      %s168 = sadd.s32 %s167, 1
      %p171 = scmp.eq.s32.totalorder %s18, 2
      %p172 = scmp.ne.s32.totalorder %s167, %s169
      %p173 = scmp.eq.s32.totalorder %s18, 0
      %p174 = por %p172, %p173
      %p175 = scmp.ne.s32.totalorder %s167, %s169
      %p176 = scmp.eq.s32.totalorder %s23, 2
      %p177 = por %p175, %p176
      %p178 = scmp.ne.s32.totalorder %s169, %s170
      %p179 = scmp.eq.s32.totalorder %s23, 0
      %p180 = por %p178, %p179
      %p181 = scmp.ne.s32.totalorder %s169, %s170
      %p182 = scmp.eq.s32.totalorder %s24, 2
      %p183 = por %p181, %p182
      %p185 = scmp.ne.s32.totalorder %s170, %s184
      %p186 = scmp.eq.s32.totalorder %s24, 0
      %p187 = por %p185, %p186
      %p188 = scmp.le.s32.totalorder 1, %s18
      %p189 = scmp.lt.s32.totalorder %s18, 4
      %p190 = pnand %p188, %p189
      %p191 = pneg %p190
      // Predicated region
      $region9: #{tpu_custom_call.1} parent=5 // pred_check
        _
      $region10: #{tpu_custom_call.1} parent=5 // pred_check_branch
        %193 = sbr.rel (%p190) target = $region12
      $region11: #{tpu_custom_call.1} parent=5 // pred_region
        %s194 = ssub.s32 %s18, 1
        // Predicated region
        $region13: #{tpu_custom_call.1} parent=11 // pred_check
          %p195 = pneg %p39
        $region14: #{tpu_custom_call.1} parent=11 // pred_check_branch
          %197 = sbr.rel (%p195) target = $region16
        $region15: #{tpu_custom_call.1} parent=11 // pred_region
          %s199 = ssub.s32 1024, 1024
          %200 = vsyncadd [#allocation4], %s199
          %s201 = sshll.u32 [#allocation3], 4
          %s202 = int_to_ptr.vmem [resolvable:$true] %s201
          %207 = dma.hbm_to_vmem [thread:$0]  %s0, 1024, %s202, [#allocation4], 128, 128, 8
        $region16: #{tpu_custom_call.1} parent=11 // pred_fallthru
          _
        // Predicated region
        $region17: #{tpu_custom_call.1} parent=11 // pred_check
          %p208 = pneg %p138
        $region18: #{tpu_custom_call.1} parent=11 // pred_check_branch
          %210 = sbr.rel (%p208) target = $region20
        $region19: #{tpu_custom_call.1} parent=11 // pred_region
          %s212 = ssub.s32 2048, 2048
          %213 = vsyncadd [#allocation10], %s212
          %s214 = sshll.u32 [#allocation9], 4
          %s215 = int_to_ptr.vmem [resolvable:$true] %s214
          %220 = dma.hbm_to_vmem [thread:$0]  %s4, 2048, %s215, [#allocation10], 128, 128, 8
        $region20: #{tpu_custom_call.1} parent=11 // pred_fallthru
          _
        // Predicated region
        $region21: #{tpu_custom_call.1} parent=11 // pred_check
          %p221 = pneg %p159
        $region22: #{tpu_custom_call.1} parent=11 // pred_check_branch
          %223 = sbr.rel (%p221) target = $region24
        $region23: #{tpu_custom_call.1} parent=11 // pred_region
          _
        $region24: #{tpu_custom_call.1} parent=11 // pred_fallthru
          _
      $region12: #{tpu_custom_call.1} parent=5 // pred_fallthru
        _
      %p224 = scmp.lt.s32.totalorder %s18, 3
      // Predicated region
      $region25: #{tpu_custom_call.1} parent=5 // pred_check
        %p225 = pneg %p224
      $region26: #{tpu_custom_call.1} parent=5 // pred_check_branch
        %227 = sbr.rel (%p225) target = $region28
      $region27: #{tpu_custom_call.1} parent=5 // pred_region
        // Predicated region
        $region29: #{tpu_custom_call.1} parent=27 // pred_check
          %p228 = pneg %p59
        $region30: #{tpu_custom_call.1} parent=27 // pred_check_branch
          %230 = sbr.rel (%p228) target = $region32
        $region31: #{tpu_custom_call.1} parent=27 // pred_region
          %s231 = sand.u32 %s18, 1
          %s232 = scalar_lea.sflag [#allocation7], %s231
          %s233 = sand.u32 %s49, 1
          %s234 = smul.addr %s233, 128
          %s235 = scalar_lea.vmem [#allocation6], %s234
          %s237 = ssub.s32 2048, 2048
          %238 = vsyncadd %s232, %s237
          %s239 = smul.addr %s18, 16
          %s240 = smul.addr %s239, 128
          %s241 = scalar_lea.hbm %s1, %s240
          %s242 = sshll.u32 %s235, 4
          %s243 = int_to_ptr.vmem [resolvable:$true] %s242
          %248 = dma.hbm_to_vmem [thread:$0]  %s241, 2048, %s243, %s232, 128, 128, 8
        $region32: #{tpu_custom_call.1} parent=27 // pred_fallthru
          _
        // Predicated region
        $region33: #{tpu_custom_call.1} parent=27 // pred_check
          %p249 = pneg %p85
        $region34: #{tpu_custom_call.1} parent=27 // pred_check_branch
          %251 = sbr.rel (%p249) target = $region36
        $region35: #{tpu_custom_call.1} parent=27 // pred_region
          %s252 = sand.u32 %s18, 1
          %s253 = scalar_lea.sflag [#allocation7], %s252
          %s254 = sand.u32 %s75, 1
          %s255 = smul.addr %s254, 128
          %s256 = scalar_lea.vmem [#allocation8], %s255
          %s258 = ssub.s32 2048, 2048
          %259 = vsyncadd %s253, %s258
          %s260 = smul.addr %s18, 16
          %s261 = smul.addr %s260, 128
          %s262 = scalar_lea.hbm %s2, %s261
          %s263 = sshll.u32 %s256, 4
          %s264 = int_to_ptr.vmem [resolvable:$true] %s263
          %269 = dma.hbm_to_vmem [thread:$0]  %s262, 2048, %s264, %s253, 128, 128, 8
        $region36: #{tpu_custom_call.1} parent=27 // pred_fallthru
          _
        // Predicated region
        $region37: #{tpu_custom_call.1} parent=27 // pred_check
          %p270 = pneg %p111
        $region38: #{tpu_custom_call.1} parent=27 // pred_check_branch
          %272 = sbr.rel (%p270) target = $region40
        $region39: #{tpu_custom_call.1} parent=27 // pred_region
          %p273 = scmp.lt.s32.totalorder %s18, 2
          %s274 = scalar_select %p273, %s18, 2
          %s275 = scalar_lea.vmem %s3, %s274
        $region40: #{tpu_custom_call.1} parent=27 // pred_fallthru
          _
      $region28: #{tpu_custom_call.1} parent=5 // pred_fallthru
        _
      %p276 = scmp.le.s32.totalorder 1, %s18
      %p277 = scmp.lt.s32.totalorder %s18, 4
      %p278 = pnand %p276, %p277
      %p279 = pneg %p278
      // Predicated region
      $region41: #{tpu_custom_call.1} parent=5 // pred_check
        _
      $region42: #{tpu_custom_call.1} parent=5 // pred_check_branch
        %281 = sbr.rel (%p278) target = $region44
      $region43: #{tpu_custom_call.1} parent=5 // pred_region
        %s282 = ssub.s32 %s18, 1
        // Predicated region
        $region45: #{tpu_custom_call.1} parent=43 // pred_check
          %p283 = pneg %p39
        $region46: #{tpu_custom_call.1} parent=43 // pred_check_branch
          %285 = sbr.rel (%p283) target = $region48
        $region47: #{tpu_custom_call.1} parent=43 // pred_region
          %286 = dma.done [#allocation4], 1024
        $region48: #{tpu_custom_call.1} parent=43 // pred_fallthru
          _
        %s287 = sand.u32 %s23, 1
        %s288 = scalar_lea.sflag [#allocation7], %s287
        %s289 = sand.u32 %s52, 1
        %s290 = smul.addr %s289, 128
        %s291 = scalar_lea.vmem [#allocation6], %s290
        // Predicated region
        $region49: #{tpu_custom_call.1} parent=43 // pred_check
          %p292 = pneg %p65
        $region50: #{tpu_custom_call.1} parent=43 // pred_check_branch
          %294 = sbr.rel (%p292) target = $region52
        $region51: #{tpu_custom_call.1} parent=43 // pred_region
          %295 = dma.done %s288, 2048
        $region52: #{tpu_custom_call.1} parent=43 // pred_fallthru
          _
        %s296 = sand.u32 %s23, 1
        %s297 = scalar_lea.sflag [#allocation7], %s296
        %s298 = sand.u32 %s78, 1
        %s299 = smul.addr %s298, 128
        %s300 = scalar_lea.vmem [#allocation8], %s299
        // Predicated region
        $region53: #{tpu_custom_call.1} parent=43 // pred_check
          %p301 = pneg %p91
        $region54: #{tpu_custom_call.1} parent=43 // pred_check_branch
          %303 = sbr.rel (%p301) target = $region56
        $region55: #{tpu_custom_call.1} parent=43 // pred_region
          %304 = dma.done %s297, 2048
        $region56: #{tpu_custom_call.1} parent=43 // pred_fallthru
          _
        // Predicated region
        $region57: #{tpu_custom_call.1} parent=43 // pred_check
          %p305 = pneg %p138
        $region58: #{tpu_custom_call.1} parent=43 // pred_check_branch
          %307 = sbr.rel (%p305) target = $region60
        $region59: #{tpu_custom_call.1} parent=43 // pred_region
          %308 = dma.done [#allocation10], 2048
        $region60: #{tpu_custom_call.1} parent=43 // pred_fallthru
          _
        %p309 = pneg %p39
        %p310 = pneg %p36
        %s311 = sand.u32 %s23, 1
        %s312 = scalar_lea.sflag [#allocation7], %s311
        %s313 = sand.u32 %s52, 1
        %s314 = smul.addr %s313, 128
        %s315 = scalar_lea.vmem [#allocation6], %s314
        %p316 = pneg %p65
        %p317 = pneg %p62
        %s318 = sand.u32 %s23, 1
        %s319 = scalar_lea.sflag [#allocation7], %s318
        %s320 = sand.u32 %s78, 1
        %s321 = smul.addr %s320, 128
        %s322 = scalar_lea.vmem [#allocation8], %s321
        %p323 = pneg %p91
        %p324 = pneg %p88
        %p325 = scmp.lt.s32.totalorder %s23, 2
        %s326 = scalar_select %p325, %s23, 2
        %s327 = scalar_lea.vmem %s3, %s326
        %p328 = pneg %p117
        %p329 = pneg %p114
        %p330 = pneg %p138
        %p331 = pneg %p135
        %p332 = pneg %p159
        %p333 = pneg %p156
        %p334 = pneg %p180
        %p335 = pneg %p177
        %p336 = scmp.lt.s32.totalorder %s23, 2
        %s337 = scalar_select %p336, %s23, 2
        %s338 = scalar_lea.vmem %s3, %s337
        %v339 = vld [vmem:[%s291] sm:$0xff]
        %v340 = vld [vmem:[%s291 + $0x8] sm:$0xff]
        %v341 = vld [vmem:[%s291 + $0x10] sm:$0xff]
        %v342 = vld [vmem:[%s291 + $0x18] sm:$0xff]
        %v343 = vld [vmem:[%s291 + $0x20] sm:$0xff]
        %v344 = vld [vmem:[%s291 + $0x28] sm:$0xff]
        %v345 = vld [vmem:[%s291 + $0x30] sm:$0xff]
        %v346 = vld [vmem:[%s291 + $0x38] sm:$0xff]
        %v347 = vld [vmem:[%s291 + $0x40] sm:$0xff]
        %v348 = vld [vmem:[%s291 + $0x48] sm:$0xff]
        %v349 = vld [vmem:[%s291 + $0x50] sm:$0xff]
        %v350 = vld [vmem:[%s291 + $0x58] sm:$0xff]
        %v351 = vld [vmem:[%s291 + $0x60] sm:$0xff]
        %v352 = vld [vmem:[%s291 + $0x68] sm:$0xff]
        %v353 = vld [vmem:[%s291 + $0x70] sm:$0xff]
        %v354 = vld [vmem:[%s291 + $0x78] sm:$0xff]
        %v355 = vld [vmem:[%s300] sm:$0xff]
        %v356 = vld [vmem:[%s300 + $0x8] sm:$0xff]
        %v357 = vld [vmem:[%s300 + $0x10] sm:$0xff]
        %v358 = vld [vmem:[%s300 + $0x18] sm:$0xff]
        %v359 = vld [vmem:[%s300 + $0x20] sm:$0xff]
        %v360 = vld [vmem:[%s300 + $0x28] sm:$0xff]
        %v361 = vld [vmem:[%s300 + $0x30] sm:$0xff]
        %v362 = vld [vmem:[%s300 + $0x38] sm:$0xff]
        %v363 = vld [vmem:[%s300 + $0x40] sm:$0xff]
        %v364 = vld [vmem:[%s300 + $0x48] sm:$0xff]
        %v365 = vld [vmem:[%s300 + $0x50] sm:$0xff]
        %v366 = vld [vmem:[%s300 + $0x58] sm:$0xff]
        %v367 = vld [vmem:[%s300 + $0x60] sm:$0xff]
        %v368 = vld [vmem:[%s300 + $0x68] sm:$0xff]
        %v369 = vld [vmem:[%s300 + $0x70] sm:$0xff]
        %v370 = vld [vmem:[%s300 + $0x78] sm:$0xff]
        %v371 = vld [vmem:[%s338] sm:$0x1]
        %p372 = scmp.eq.s32.totalorder %s23, 0
        // Predicated region
        $region61: #{tpu_custom_call.1} parent=43 // pred_check
          %p373 = pneg %p372
        $region62: #{tpu_custom_call.1} parent=43 // pred_check_branch
          %375 = sbr.rel (%p373) target = $region64
        $region63: #{tpu_custom_call.1} parent=43 // pred_region
          %v376 = vld [vmem:[#allocation3] sm:$0xff]
          %v377 = vld [vmem:[#allocation3 + $0x8] sm:$0xff]
          %v378 = vld [vmem:[#allocation3 + $0x10] sm:$0xff]
          %v379 = vld [vmem:[#allocation3 + $0x18] sm:$0xff]
          %v380 = vld [vmem:[#allocation3 + $0x20] sm:$0xff]
          %v381 = vld [vmem:[#allocation3 + $0x28] sm:$0xff]
          %v382 = vld [vmem:[#allocation3 + $0x30] sm:$0xff]
          %v383 = vld [vmem:[#allocation3 + $0x38] sm:$0xff]
          %385 = vset.pattern.permute.xlu0 0
          %386 = vperm.xlu0 %385, %v376
          %v387 = vpop.permute.xlu0 %386
          %390 = vset.pattern.permute.xlu0 0
          %391 = vperm.xlu0 %390, %v377
          %v392 = vpop.permute.xlu0 %391
          %395 = vset.pattern.permute.xlu0 0
          %396 = vperm.xlu0 %395, %v378
          %v397 = vpop.permute.xlu0 %396
          %400 = vset.pattern.permute.xlu0 0
          %401 = vperm.xlu0 %400, %v379
          %v402 = vpop.permute.xlu0 %401
          %405 = vset.pattern.permute.xlu0 0
          %406 = vperm.xlu0 %405, %v380
          %v407 = vpop.permute.xlu0 %406
          %410 = vset.pattern.permute.xlu0 0
          %411 = vperm.xlu0 %410, %v381
          %v412 = vpop.permute.xlu0 %411
          %415 = vset.pattern.permute.xlu0 0
          %416 = vperm.xlu0 %415, %v382
          %v417 = vpop.permute.xlu0 %416
          %420 = vset.pattern.permute.xlu0 0
          %421 = vperm.xlu0 %420, %v383
          %v422 = vpop.permute.xlu0 %421
          %v424 = vlaneseq
          %v425 = vshrl.u32 %v424, 7
          %v426 = vsub.s32 0, %v425
          %v427 = vrot.slane %v339, %v426
          %v428 = vmul.f32 %v387, %v427
          %v429 = vmul.f32 %v392, %v427
          %v430 = vmul.f32 %v397, %v427
          %v431 = vmul.f32 %v402, %v427
          %v432 = vmul.f32 %v407, %v427
          %v433 = vmul.f32 %v412, %v427
          %v434 = vmul.f32 %v417, %v427
          %v435 = vmul.f32 %v422, %v427
          %v437 = vlaneseq
          %v438 = vshrl.u32 %v437, 7
          %v439 = vsub.s32 0, %v438
          %v440 = vrot.slane %v371, %v439
          %v442 = vadd.f32 %v428, %v440
          %v443 = vadd.f32 %v429, %v440
          %v444 = vadd.f32 %v430, %v440
          %v445 = vadd.f32 %v431, %v440
          %v446 = vadd.f32 %v432, %v440
          %v447 = vadd.f32 %v433, %v440
          %v448 = vadd.f32 %v434, %v440
          %v449 = vadd.f32 %v435, %v440
          %450 = vst [vmem:[#allocation2] sm:$0xff] %v442
          %451 = vst [vmem:[#allocation2 + $0x8] sm:$0xff] %v443
          %452 = vst [vmem:[#allocation2 + $0x10] sm:$0xff] %v444
          %453 = vst [vmem:[#allocation2 + $0x18] sm:$0xff] %v445
          %454 = vst [vmem:[#allocation2 + $0x20] sm:$0xff] %v446
          %455 = vst [vmem:[#allocation2 + $0x28] sm:$0xff] %v447
          %456 = vst [vmem:[#allocation2 + $0x30] sm:$0xff] %v448
          %457 = vst [vmem:[#allocation2 + $0x38] sm:$0xff] %v449
        $region64: #{tpu_custom_call.1} parent=43 // pred_fallthru
          _
        %p458 = scmp.ne.s32.totalorder %s23, 0
        // Predicated region
        $region65: #{tpu_custom_call.1} parent=43 // pred_check
          %p459 = pneg %p458
        $region66: #{tpu_custom_call.1} parent=43 // pred_check_branch
          %461 = sbr.rel (%p459) target = $region68
        $region67: #{tpu_custom_call.1} parent=43 // pred_region
          %v462 = vld [vmem:[#allocation2] sm:$0xff]
          %v463 = vld [vmem:[#allocation2 + $0x8] sm:$0xff]
          %v464 = vld [vmem:[#allocation2 + $0x10] sm:$0xff]
          %v465 = vld [vmem:[#allocation2 + $0x18] sm:$0xff]
          %v466 = vld [vmem:[#allocation2 + $0x20] sm:$0xff]
          %v467 = vld [vmem:[#allocation2 + $0x28] sm:$0xff]
          %v468 = vld [vmem:[#allocation2 + $0x30] sm:$0xff]
          %v469 = vld [vmem:[#allocation2 + $0x38] sm:$0xff]
          %v471 = vlaneseq
          %v472 = vshrl.u32 %v471, 7
          %v473 = vsub.s32 0, %v472
          %v474 = vrot.slane %v371, %v473
          %476 = vmatprep.subr.mxu0 0.0
          %477 = vmatpush1.msra.mxu0 %v339
          %478 = vmatprep.subr.mxu0 0.0
          %479 = vmatpush1.msra.mxu0 %v340
          %480 = vmatprep.subr.mxu0 0.0
          %481 = vmatpush1.msra.mxu0 %v341
          %482 = vmatprep.subr.mxu0 0.0
          %483 = vmatpush1.msra.mxu0 %v342
          %484 = vmatprep.subr.mxu0 0.0
          %485 = vmatpush1.msra.mxu0 %v343
          %486 = vmatprep.subr.mxu0 0.0
          %487 = vmatpush1.msra.mxu0 %v344
          %488 = vmatprep.subr.mxu0 0.0
          %489 = vmatpush1.msra.mxu0 %v345
          %490 = vmatprep.subr.mxu0 0.0
          %491 = vmatpush1.msra.mxu0 %v346
          %492 = vmatprep.subr.mxu0 0.0
          %493 = vmatpush1.msra.mxu0 %v347
          %494 = vmatprep.subr.mxu0 0.0
          %495 = vmatpush1.msra.mxu0 %v348
          %496 = vmatprep.subr.mxu0 0.0
          %497 = vmatpush1.msra.mxu0 %v349
          %498 = vmatprep.subr.mxu0 0.0
          %499 = vmatpush1.msra.mxu0 %v350
          %500 = vmatprep.subr.mxu0 0.0
          %501 = vmatpush1.msra.mxu0 %v351
          %502 = vmatprep.subr.mxu0 0.0
          %503 = vmatpush1.msra.mxu0 %v352
          %504 = vmatprep.subr.mxu0 0.0
          %505 = vmatpush1.msra.mxu0 %v353
          %506 = vmatprep.subr.mxu0 0.0
          %507 = vmatpush1.msra.mxu0 %v354
          %508 = vmatprep.subr.mxu0 0.0
          %509 = vmatpush1.msra.mxu0 0.0
          %510 = vmatprep.subr.mxu0 0.0
          %511 = vmatpush1.msra.mxu0 0.0
          %512 = vmatprep.subr.mxu0 0.0
          %513 = vmatpush1.msra.mxu0 0.0
          %514 = vmatprep.subr.mxu0 0.0
          %515 = vmatpush1.msra.mxu0 0.0
          %516 = vmatprep.subr.mxu0 0.0
          %517 = vmatpush1.msra.mxu0 0.0
          %518 = vmatprep.subr.mxu0 0.0
          %519 = vmatpush1.msra.mxu0 0.0
          %520 = vmatprep.subr.mxu0 0.0
          %521 = vmatpush1.msra.mxu0 0.0
          %522 = vmatprep.subr.mxu0 0.0
          %523 = vmatpush1.msra.mxu0 0.0
          %524 = vmatprep.subr.mxu0 0.0
          %525 = vmatpush1.msra.mxu0 0.0
          %526 = vmatprep.subr.mxu0 0.0
          %527 = vmatpush1.msra.mxu0 0.0
          %528 = vmatprep.subr.mxu0 0.0
          %529 = vmatpush1.msra.mxu0 0.0
          %530 = vmatprep.subr.mxu0 0.0
          %531 = vmatpush1.msra.mxu0 0.0
          %532 = vmatprep.subr.mxu0 0.0
          %533 = vmatpush1.msra.mxu0 0.0
          %534 = vmatprep.subr.mxu0 0.0
          %535 = vmatpush1.msra.mxu0 0.0
          %536 = vmatprep.subr.mxu0 0.0
          %537 = vmatpush1.msra.mxu0 0.0
          %538 = vmatprep.subr.mxu0 0.0
          %539 = vmatpush1.msra.mxu0 0.0
          %540 = vmatprep.mubr.f32.mxu0 0.0
          %541 = vmatmul.mubr.f32.gmra.mrb[0].mxu0 %v462
          %v542 = vpop.f32.mrb[0].mxu0
          %v543 = vadd.f32 %v474, %v542
          %v544 = vpop.f32.mrb[0].mxu0
          %545 = vmatprep.mubr.f32.mxu0 0.0
          %546 = vmatmul.mubr.f32.gmra.mrb[0].mxu0 %v463
          %v547 = vpop.f32.mrb[0].mxu0
          %v548 = vadd.f32 %v474, %v547
          %v549 = vpop.f32.mrb[0].mxu0
          %550 = vmatprep.mubr.f32.mxu0 0.0
          %551 = vmatmul.mubr.f32.gmra.mrb[0].mxu0 %v464
          %v552 = vpop.f32.mrb[0].mxu0
          %v553 = vadd.f32 %v474, %v552
          %v554 = vpop.f32.mrb[0].mxu0
          %555 = vmatprep.mubr.f32.mxu0 0.0
          %556 = vmatmul.mubr.f32.gmra.mrb[0].mxu0 %v465
          %v557 = vpop.f32.mrb[0].mxu0
          %v558 = vadd.f32 %v474, %v557
          %v559 = vpop.f32.mrb[0].mxu0
          %560 = vmatprep.mubr.f32.mxu0 0.0
          %561 = vmatmul.mubr.f32.gmra.mrb[0].mxu0 %v466
          %v562 = vpop.f32.mrb[0].mxu0
          %v563 = vadd.f32 %v474, %v562
          %v564 = vpop.f32.mrb[0].mxu0
          %565 = vmatprep.mubr.f32.mxu0 0.0
          %566 = vmatmul.mubr.f32.gmra.mrb[0].mxu0 %v467
          %v567 = vpop.f32.mrb[0].mxu0
          %v568 = vadd.f32 %v474, %v567
          %v569 = vpop.f32.mrb[0].mxu0
          %570 = vmatprep.mubr.f32.mxu0 0.0
          %571 = vmatmul.mubr.f32.gmra.mrb[0].mxu0 %v468
          %v572 = vpop.f32.mrb[0].mxu0
          %v573 = vadd.f32 %v474, %v572
          %v574 = vpop.f32.mrb[0].mxu0
          %575 = vmatprep.mubr.f32.mxu0 0.0
          %576 = vmatmul.mubr.f32.gmra.mrb[0].mxu0 %v469
          %v577 = vpop.f32.mrb[0].mxu0
          %v578 = vadd.f32 %v474, %v577
          %v579 = vpop.f32.mrb[0].mxu0
          %580 = vdwg.mxu0
          %581 = vst [vmem:[#allocation2] sm:$0xff] %v543
          %582 = vst [vmem:[#allocation2 + $0x8] sm:$0xff] %v548
          %583 = vst [vmem:[#allocation2 + $0x10] sm:$0xff] %v553
          %584 = vst [vmem:[#allocation2 + $0x18] sm:$0xff] %v558
          %585 = vst [vmem:[#allocation2 + $0x20] sm:$0xff] %v563
          %586 = vst [vmem:[#allocation2 + $0x28] sm:$0xff] %v568
          %587 = vst [vmem:[#allocation2 + $0x30] sm:$0xff] %v573
          %588 = vst [vmem:[#allocation2 + $0x38] sm:$0xff] %v578
        $region68: #{tpu_custom_call.1} parent=43 // pred_fallthru
          _
        %v589 = vld [vmem:[#allocation2] sm:$0xff]
        %v590 = vld [vmem:[#allocation2 + $0x8] sm:$0xff]
        %v591 = vld [vmem:[#allocation2 + $0x10] sm:$0xff]
        %v592 = vld [vmem:[#allocation2 + $0x18] sm:$0xff]
        %v593 = vld [vmem:[#allocation2 + $0x20] sm:$0xff]
        %v594 = vld [vmem:[#allocation2 + $0x28] sm:$0xff]
        %v595 = vld [vmem:[#allocation2 + $0x30] sm:$0xff]
        %v596 = vld [vmem:[#allocation2 + $0x38] sm:$0xff]
        %597 = vmatprep.subr.mxu0 0.0
        %598 = vmatpush1.msra.mxu0 %v355
        %599 = vmatprep.subr.mxu0 0.0
        %600 = vmatpush1.msra.mxu0 %v356
        %601 = vmatprep.subr.mxu0 0.0
        %602 = vmatpush1.msra.mxu0 %v357
        %603 = vmatprep.subr.mxu0 0.0
        %604 = vmatpush1.msra.mxu0 %v358
        %605 = vmatprep.subr.mxu0 0.0
        %606 = vmatpush1.msra.mxu0 %v359
        %607 = vmatprep.subr.mxu0 0.0
        %608 = vmatpush1.msra.mxu0 %v360
        %609 = vmatprep.subr.mxu0 0.0
        %610 = vmatpush1.msra.mxu0 %v361
        %611 = vmatprep.subr.mxu0 0.0
        %612 = vmatpush1.msra.mxu0 %v362
        %613 = vmatprep.subr.mxu0 0.0
        %614 = vmatpush1.msra.mxu0 %v363
        %615 = vmatprep.subr.mxu0 0.0
        %616 = vmatpush1.msra.mxu0 %v364
        %617 = vmatprep.subr.mxu0 0.0
        %618 = vmatpush1.msra.mxu0 %v365
        %619 = vmatprep.subr.mxu0 0.0
        %620 = vmatpush1.msra.mxu0 %v366
        %621 = vmatprep.subr.mxu0 0.0
        %622 = vmatpush1.msra.mxu0 %v367
        %623 = vmatprep.subr.mxu0 0.0
        %624 = vmatpush1.msra.mxu0 %v368
        %625 = vmatprep.subr.mxu0 0.0
        %626 = vmatpush1.msra.mxu0 %v369
        %627 = vmatprep.subr.mxu0 0.0
        %628 = vmatpush1.msra.mxu0 %v370
        %629 = vmatprep.subr.mxu0 0.0
        %630 = vmatpush1.msra.mxu0 0.0
        %631 = vmatprep.subr.mxu0 0.0
        %632 = vmatpush1.msra.mxu0 0.0
        %633 = vmatprep.subr.mxu0 0.0
        %634 = vmatpush1.msra.mxu0 0.0
        %635 = vmatprep.subr.mxu0 0.0
        %636 = vmatpush1.msra.mxu0 0.0
        %637 = vmatprep.subr.mxu0 0.0
        %638 = vmatpush1.msra.mxu0 0.0
        %639 = vmatprep.subr.mxu0 0.0
        %640 = vmatpush1.msra.mxu0 0.0
        %641 = vmatprep.subr.mxu0 0.0
        %642 = vmatpush1.msra.mxu0 0.0
        %643 = vmatprep.subr.mxu0 0.0
        %644 = vmatpush1.msra.mxu0 0.0
        %645 = vmatprep.subr.mxu0 0.0
        %646 = vmatpush1.msra.mxu0 0.0
        %647 = vmatprep.subr.mxu0 0.0
        %648 = vmatpush1.msra.mxu0 0.0
        %649 = vmatprep.subr.mxu0 0.0
        %650 = vmatpush1.msra.mxu0 0.0
        %651 = vmatprep.subr.mxu0 0.0
        %652 = vmatpush1.msra.mxu0 0.0
        %653 = vmatprep.subr.mxu0 0.0
        %654 = vmatpush1.msra.mxu0 0.0
        %655 = vmatprep.subr.mxu0 0.0
        %656 = vmatpush1.msra.mxu0 0.0
        %657 = vmatprep.subr.mxu0 0.0
        %658 = vmatpush1.msra.mxu0 0.0
        %659 = vmatprep.subr.mxu0 0.0
        %660 = vmatpush1.msra.mxu0 0.0
        %661 = vmatprep.mubr.f32.mxu0 0.0
        %662 = vmatmul.mubr.f32.gmra.mrb[0].mxu0 0.0
        %v663 = vpop.f32.mrb[0].mxu0
        %v664 = vadd.f32 0.0, %v663
        %v665 = vpop.f32.mrb[0].mxu0
        %666 = vdwg.mxu0
        %v667 = vadd.f32 %v589, %v664
        %v668 = vmax.f32 %v667, 0.0
        %669 = vst [vmem:[#allocation2] sm:$0xff] %v668
        %670 = vmatprep.subr.mxu0 0.0
        %671 = vmatpush1.msra.mxu0 %v355
        %672 = vmatprep.subr.mxu0 0.0
        %673 = vmatpush1.msra.mxu0 %v356
        %674 = vmatprep.subr.mxu0 0.0
        %675 = vmatpush1.msra.mxu0 %v357
        %676 = vmatprep.subr.mxu0 0.0
        %677 = vmatpush1.msra.mxu0 %v358
        %678 = vmatprep.subr.mxu0 0.0
        %679 = vmatpush1.msra.mxu0 %v359
        %680 = vmatprep.subr.mxu0 0.0
        %681 = vmatpush1.msra.mxu0 %v360
        %682 = vmatprep.subr.mxu0 0.0
        %683 = vmatpush1.msra.mxu0 %v361
        %684 = vmatprep.subr.mxu0 0.0
        %685 = vmatpush1.msra.mxu0 %v362
        %686 = vmatprep.subr.mxu0 0.0
        %687 = vmatpush1.msra.mxu0 %v363
        %688 = vmatprep.subr.mxu0 0.0
        %689 = vmatpush1.msra.mxu0 %v364
        %690 = vmatprep.subr.mxu0 0.0
        %691 = vmatpush1.msra.mxu0 %v365
        %692 = vmatprep.subr.mxu0 0.0
        %693 = vmatpush1.msra.mxu0 %v366
        %694 = vmatprep.subr.mxu0 0.0
        %695 = vmatpush1.msra.mxu0 %v367
        %696 = vmatprep.subr.mxu0 0.0
        %697 = vmatpush1.msra.mxu0 %v368
        %698 = vmatprep.subr.mxu0 0.0
        %699 = vmatpush1.msra.mxu0 %v369
        %700 = vmatprep.subr.mxu0 0.0
        %701 = vmatpush1.msra.mxu0 %v370
        %702 = vmatprep.subr.mxu0 0.0
        %703 = vmatpush1.msra.mxu0 0.0
        %704 = vmatprep.subr.mxu0 0.0
        %705 = vmatpush1.msra.mxu0 0.0
        %706 = vmatprep.subr.mxu0 0.0
        %707 = vmatpush1.msra.mxu0 0.0
        %708 = vmatprep.subr.mxu0 0.0
        %709 = vmatpush1.msra.mxu0 0.0
        %710 = vmatprep.subr.mxu0 0.0
        %711 = vmatpush1.msra.mxu0 0.0
        %712 = vmatprep.subr.mxu0 0.0
        %713 = vmatpush1.msra.mxu0 0.0
        %714 = vmatprep.subr.mxu0 0.0
        %715 = vmatpush1.msra.mxu0 0.0
        %716 = vmatprep.subr.mxu0 0.0
        %717 = vmatpush1.msra.mxu0 0.0
        %718 = vmatprep.subr.mxu0 0.0
        %719 = vmatpush1.msra.mxu0 0.0
        %720 = vmatprep.subr.mxu0 0.0
        %721 = vmatpush1.msra.mxu0 0.0
        %722 = vmatprep.subr.mxu0 0.0
        %723 = vmatpush1.msra.mxu0 0.0
        %724 = vmatprep.subr.mxu0 0.0
        %725 = vmatpush1.msra.mxu0 0.0
        %726 = vmatprep.subr.mxu0 0.0
        %727 = vmatpush1.msra.mxu0 0.0
        %728 = vmatprep.subr.mxu0 0.0
        %729 = vmatpush1.msra.mxu0 0.0
        %730 = vmatprep.subr.mxu0 0.0
        %731 = vmatpush1.msra.mxu0 0.0
        %732 = vmatprep.subr.mxu0 0.0
        %733 = vmatpush1.msra.mxu0 0.0
        %734 = vmatprep.mubr.f32.mxu0 0.0
        %735 = vmatmul.mubr.f32.gmra.mrb[0].mxu0 %v668
        %v736 = vpop.f32.mrb[0].mxu0
        %v737 = vadd.f32 0.0, %v736
        %v738 = vpop.f32.mrb[0].mxu0
        %739 = vdwg.mxu0
        %v740 = vadd.f32 %v590, %v737
        %v741 = vmax.f32 %v740, 0.0
        %742 = vst [vmem:[#allocation2 + $0x8] sm:$0xff] %v741
        %743 = vmatprep.subr.mxu0 0.0
        %744 = vmatpush1.msra.mxu0 %v355
        %745 = vmatprep.subr.mxu0 0.0
        %746 = vmatpush1.msra.mxu0 %v356
        %747 = vmatprep.subr.mxu0 0.0
        %748 = vmatpush1.msra.mxu0 %v357
        %749 = vmatprep.subr.mxu0 0.0
        %750 = vmatpush1.msra.mxu0 %v358
        %751 = vmatprep.subr.mxu0 0.0
        %752 = vmatpush1.msra.mxu0 %v359
        %753 = vmatprep.subr.mxu0 0.0
        %754 = vmatpush1.msra.mxu0 %v360
        %755 = vmatprep.subr.mxu0 0.0
        %756 = vmatpush1.msra.mxu0 %v361
        %757 = vmatprep.subr.mxu0 0.0
        %758 = vmatpush1.msra.mxu0 %v362
        %759 = vmatprep.subr.mxu0 0.0
        %760 = vmatpush1.msra.mxu0 %v363
        %761 = vmatprep.subr.mxu0 0.0
        %762 = vmatpush1.msra.mxu0 %v364
        %763 = vmatprep.subr.mxu0 0.0
        %764 = vmatpush1.msra.mxu0 %v365
        %765 = vmatprep.subr.mxu0 0.0
        %766 = vmatpush1.msra.mxu0 %v366
        %767 = vmatprep.subr.mxu0 0.0
        %768 = vmatpush1.msra.mxu0 %v367
        %769 = vmatprep.subr.mxu0 0.0
        %770 = vmatpush1.msra.mxu0 %v368
        %771 = vmatprep.subr.mxu0 0.0
        %772 = vmatpush1.msra.mxu0 %v369
        %773 = vmatprep.subr.mxu0 0.0
        %774 = vmatpush1.msra.mxu0 %v370
        %775 = vmatprep.subr.mxu0 0.0
        %776 = vmatpush1.msra.mxu0 0.0
        %777 = vmatprep.subr.mxu0 0.0
        %778 = vmatpush1.msra.mxu0 0.0
        %779 = vmatprep.subr.mxu0 0.0
        %780 = vmatpush1.msra.mxu0 0.0
        %781 = vmatprep.subr.mxu0 0.0
        %782 = vmatpush1.msra.mxu0 0.0
        %783 = vmatprep.subr.mxu0 0.0
        %784 = vmatpush1.msra.mxu0 0.0
        %785 = vmatprep.subr.mxu0 0.0
        %786 = vmatpush1.msra.mxu0 0.0
        %787 = vmatprep.subr.mxu0 0.0
        %788 = vmatpush1.msra.mxu0 0.0
        %789 = vmatprep.subr.mxu0 0.0
        %790 = vmatpush1.msra.mxu0 0.0
        %791 = vmatprep.subr.mxu0 0.0
        %792 = vmatpush1.msra.mxu0 0.0
        %793 = vmatprep.subr.mxu0 0.0
        %794 = vmatpush1.msra.mxu0 0.0
        %795 = vmatprep.subr.mxu0 0.0
        %796 = vmatpush1.msra.mxu0 0.0
        %797 = vmatprep.subr.mxu0 0.0
        %798 = vmatpush1.msra.mxu0 0.0
        %799 = vmatprep.subr.mxu0 0.0
        %800 = vmatpush1.msra.mxu0 0.0
        %801 = vmatprep.subr.mxu0 0.0
        %802 = vmatpush1.msra.mxu0 0.0
        %803 = vmatprep.subr.mxu0 0.0
        %804 = vmatpush1.msra.mxu0 0.0
        %805 = vmatprep.subr.mxu0 0.0
        %806 = vmatpush1.msra.mxu0 0.0
        %807 = vmatprep.mubr.f32.mxu0 0.0
        %808 = vmatmul.mubr.f32.gmra.mrb[0].mxu0 %v741
        %v809 = vpop.f32.mrb[0].mxu0
        %v810 = vadd.f32 0.0, %v809
        %v811 = vpop.f32.mrb[0].mxu0
        %812 = vdwg.mxu0
        %v813 = vadd.f32 %v591, %v810
        %v814 = vmax.f32 %v813, 0.0
        %815 = vst [vmem:[#allocation2 + $0x10] sm:$0xff] %v814
        %816 = vmatprep.subr.mxu0 0.0
        %817 = vmatpush1.msra.mxu0 %v355
        %818 = vmatprep.subr.mxu0 0.0
        %819 = vmatpush1.msra.mxu0 %v356
        %820 = vmatprep.subr.mxu0 0.0
        %821 = vmatpush1.msra.mxu0 %v357
        %822 = vmatprep.subr.mxu0 0.0
        %823 = vmatpush1.msra.mxu0 %v358
        %824 = vmatprep.subr.mxu0 0.0
        %825 = vmatpush1.msra.mxu0 %v359
        %826 = vmatprep.subr.mxu0 0.0
        %827 = vmatpush1.msra.mxu0 %v360
        %828 = vmatprep.subr.mxu0 0.0
        %829 = vmatpush1.msra.mxu0 %v361
        %830 = vmatprep.subr.mxu0 0.0
        %831 = vmatpush1.msra.mxu0 %v362
        %832 = vmatprep.subr.mxu0 0.0
        %833 = vmatpush1.msra.mxu0 %v363
        %834 = vmatprep.subr.mxu0 0.0
        %835 = vmatpush1.msra.mxu0 %v364
        %836 = vmatprep.subr.mxu0 0.0
        %837 = vmatpush1.msra.mxu0 %v365
        %838 = vmatprep.subr.mxu0 0.0
        %839 = vmatpush1.msra.mxu0 %v366
        %840 = vmatprep.subr.mxu0 0.0
        %841 = vmatpush1.msra.mxu0 %v367
        %842 = vmatprep.subr.mxu0 0.0
        %843 = vmatpush1.msra.mxu0 %v368
        %844 = vmatprep.subr.mxu0 0.0
        %845 = vmatpush1.msra.mxu0 %v369
        %846 = vmatprep.subr.mxu0 0.0
        %847 = vmatpush1.msra.mxu0 %v370
        %848 = vmatprep.subr.mxu0 0.0
        %849 = vmatpush1.msra.mxu0 0.0
        %850 = vmatprep.subr.mxu0 0.0
        %851 = vmatpush1.msra.mxu0 0.0
        %852 = vmatprep.subr.mxu0 0.0
        %853 = vmatpush1.msra.mxu0 0.0
        %854 = vmatprep.subr.mxu0 0.0
        %855 = vmatpush1.msra.mxu0 0.0
        %856 = vmatprep.subr.mxu0 0.0
        %857 = vmatpush1.msra.mxu0 0.0
        %858 = vmatprep.subr.mxu0 0.0
        %859 = vmatpush1.msra.mxu0 0.0
        %860 = vmatprep.subr.mxu0 0.0
        %861 = vmatpush1.msra.mxu0 0.0
        %862 = vmatprep.subr.mxu0 0.0
        %863 = vmatpush1.msra.mxu0 0.0
        %864 = vmatprep.subr.mxu0 0.0
        %865 = vmatpush1.msra.mxu0 0.0
        %866 = vmatprep.subr.mxu0 0.0
        %867 = vmatpush1.msra.mxu0 0.0
        %868 = vmatprep.subr.mxu0 0.0
        %869 = vmatpush1.msra.mxu0 0.0
        %870 = vmatprep.subr.mxu0 0.0
        %871 = vmatpush1.msra.mxu0 0.0
        %872 = vmatprep.subr.mxu0 0.0
        %873 = vmatpush1.msra.mxu0 0.0
        %874 = vmatprep.subr.mxu0 0.0
        %875 = vmatpush1.msra.mxu0 0.0
        %876 = vmatprep.subr.mxu0 0.0
        %877 = vmatpush1.msra.mxu0 0.0
        %878 = vmatprep.subr.mxu0 0.0
        %879 = vmatpush1.msra.mxu0 0.0
        %880 = vmatprep.mubr.f32.mxu0 0.0
        %881 = vmatmul.mubr.f32.gmra.mrb[0].mxu0 %v814
        %v882 = vpop.f32.mrb[0].mxu0
        %v883 = vadd.f32 0.0, %v882
        %v884 = vpop.f32.mrb[0].mxu0
        %885 = vdwg.mxu0
        %v886 = vadd.f32 %v592, %v883
        %v887 = vmax.f32 %v886, 0.0
        %888 = vst [vmem:[#allocation2 + $0x18] sm:$0xff] %v887
        %889 = vmatprep.subr.mxu0 0.0
        %890 = vmatpush1.msra.mxu0 %v355
        %891 = vmatprep.subr.mxu0 0.0
        %892 = vmatpush1.msra.mxu0 %v356
        %893 = vmatprep.subr.mxu0 0.0
        %894 = vmatpush1.msra.mxu0 %v357
        %895 = vmatprep.subr.mxu0 0.0
        %896 = vmatpush1.msra.mxu0 %v358
        %897 = vmatprep.subr.mxu0 0.0
        %898 = vmatpush1.msra.mxu0 %v359
        %899 = vmatprep.subr.mxu0 0.0
        %900 = vmatpush1.msra.mxu0 %v360
        %901 = vmatprep.subr.mxu0 0.0
        %902 = vmatpush1.msra.mxu0 %v361
        %903 = vmatprep.subr.mxu0 0.0
        %904 = vmatpush1.msra.mxu0 %v362
        %905 = vmatprep.subr.mxu0 0.0
        %906 = vmatpush1.msra.mxu0 %v363
        %907 = vmatprep.subr.mxu0 0.0
        %908 = vmatpush1.msra.mxu0 %v364
        %909 = vmatprep.subr.mxu0 0.0
        %910 = vmatpush1.msra.mxu0 %v365
        %911 = vmatprep.subr.mxu0 0.0
        %912 = vmatpush1.msra.mxu0 %v366
        %913 = vmatprep.subr.mxu0 0.0
        %914 = vmatpush1.msra.mxu0 %v367
        %915 = vmatprep.subr.mxu0 0.0
        %916 = vmatpush1.msra.mxu0 %v368
        %917 = vmatprep.subr.mxu0 0.0
        %918 = vmatpush1.msra.mxu0 %v369
        %919 = vmatprep.subr.mxu0 0.0
        %920 = vmatpush1.msra.mxu0 %v370
        %921 = vmatprep.subr.mxu0 0.0
        %922 = vmatpush1.msra.mxu0 0.0
        %923 = vmatprep.subr.mxu0 0.0
        %924 = vmatpush1.msra.mxu0 0.0
        %925 = vmatprep.subr.mxu0 0.0
        %926 = vmatpush1.msra.mxu0 0.0
        %927 = vmatprep.subr.mxu0 0.0
        %928 = vmatpush1.msra.mxu0 0.0
        %929 = vmatprep.subr.mxu0 0.0
        %930 = vmatpush1.msra.mxu0 0.0
        %931 = vmatprep.subr.mxu0 0.0
        %932 = vmatpush1.msra.mxu0 0.0
        %933 = vmatprep.subr.mxu0 0.0
        %934 = vmatpush1.msra.mxu0 0.0
        %935 = vmatprep.subr.mxu0 0.0
        %936 = vmatpush1.msra.mxu0 0.0
        %937 = vmatprep.subr.mxu0 0.0
        %938 = vmatpush1.msra.mxu0 0.0
        %939 = vmatprep.subr.mxu0 0.0
        %940 = vmatpush1.msra.mxu0 0.0
        %941 = vmatprep.subr.mxu0 0.0
        %942 = vmatpush1.msra.mxu0 0.0
        %943 = vmatprep.subr.mxu0 0.0
        %944 = vmatpush1.msra.mxu0 0.0
        %945 = vmatprep.subr.mxu0 0.0
        %946 = vmatpush1.msra.mxu0 0.0
        %947 = vmatprep.subr.mxu0 0.0
        %948 = vmatpush1.msra.mxu0 0.0
        %949 = vmatprep.subr.mxu0 0.0
        %950 = vmatpush1.msra.mxu0 0.0
        %951 = vmatprep.subr.mxu0 0.0
        %952 = vmatpush1.msra.mxu0 0.0
        %953 = vmatprep.mubr.f32.mxu0 0.0
        %954 = vmatmul.mubr.f32.gmra.mrb[0].mxu0 %v887
        %v955 = vpop.f32.mrb[0].mxu0
        %v956 = vadd.f32 0.0, %v955
        %v957 = vpop.f32.mrb[0].mxu0
        %958 = vdwg.mxu0
        %v959 = vadd.f32 %v593, %v956
        %v960 = vmax.f32 %v959, 0.0
        %961 = vst [vmem:[#allocation2 + $0x20] sm:$0xff] %v960
        %962 = vmatprep.subr.mxu0 0.0
        %963 = vmatpush1.msra.mxu0 %v355
        %964 = vmatprep.subr.mxu0 0.0
        %965 = vmatpush1.msra.mxu0 %v356
        %966 = vmatprep.subr.mxu0 0.0
        %967 = vmatpush1.msra.mxu0 %v357
        %968 = vmatprep.subr.mxu0 0.0
        %969 = vmatpush1.msra.mxu0 %v358
        %970 = vmatprep.subr.mxu0 0.0
        %971 = vmatpush1.msra.mxu0 %v359
        %972 = vmatprep.subr.mxu0 0.0
        %973 = vmatpush1.msra.mxu0 %v360
        %974 = vmatprep.subr.mxu0 0.0
        %975 = vmatpush1.msra.mxu0 %v361
        %976 = vmatprep.subr.mxu0 0.0
        %977 = vmatpush1.msra.mxu0 %v362
        %978 = vmatprep.subr.mxu0 0.0
        %979 = vmatpush1.msra.mxu0 %v363
        %980 = vmatprep.subr.mxu0 0.0
        %981 = vmatpush1.msra.mxu0 %v364
        %982 = vmatprep.subr.mxu0 0.0
        %983 = vmatpush1.msra.mxu0 %v365
        %984 = vmatprep.subr.mxu0 0.0
        %985 = vmatpush1.msra.mxu0 %v366
        %986 = vmatprep.subr.mxu0 0.0
        %987 = vmatpush1.msra.mxu0 %v367
        %988 = vmatprep.subr.mxu0 0.0
        %989 = vmatpush1.msra.mxu0 %v368
        %990 = vmatprep.subr.mxu0 0.0
        %991 = vmatpush1.msra.mxu0 %v369
        %992 = vmatprep.subr.mxu0 0.0
        %993 = vmatpush1.msra.mxu0 %v370
        %994 = vmatprep.subr.mxu0 0.0
        %995 = vmatpush1.msra.mxu0 0.0
        %996 = vmatprep.subr.mxu0 0.0
        %997 = vmatpush1.msra.mxu0 0.0
        %998 = vmatprep.subr.mxu0 0.0
        %999 = vmatpush1.msra.mxu0 0.0
        %1000 = vmatprep.subr.mxu0 0.0
        %1001 = vmatpush1.msra.mxu0 0.0
        %1002 = vmatprep.subr.mxu0 0.0
        %1003 = vmatpush1.msra.mxu0 0.0
        %1004 = vmatprep.subr.mxu0 0.0
        %1005 = vmatpush1.msra.mxu0 0.0
        %1006 = vmatprep.subr.mxu0 0.0
        %1007 = vmatpush1.msra.mxu0 0.0
        %1008 = vmatprep.subr.mxu0 0.0
        %1009 = vmatpush1.msra.mxu0 0.0
        %1010 = vmatprep.subr.mxu0 0.0
        %1011 = vmatpush1.msra.mxu0 0.0
        %1012 = vmatprep.subr.mxu0 0.0
        %1013 = vmatpush1.msra.mxu0 0.0
        %1014 = vmatprep.subr.mxu0 0.0
        %1015 = vmatpush1.msra.mxu0 0.0
        %1016 = vmatprep.subr.mxu0 0.0
        %1017 = vmatpush1.msra.mxu0 0.0
        %1018 = vmatprep.subr.mxu0 0.0
        %1019 = vmatpush1.msra.mxu0 0.0
        %1020 = vmatprep.subr.mxu0 0.0
        %1021 = vmatpush1.msra.mxu0 0.0
        %1022 = vmatprep.subr.mxu0 0.0
        %1023 = vmatpush1.msra.mxu0 0.0
        %1024 = vmatprep.subr.mxu0 0.0
        %1025 = vmatpush1.msra.mxu0 0.0
        %1026 = vmatprep.mubr.f32.mxu0 0.0
        %1027 = vmatmul.mubr.f32.gmra.mrb[0].mxu0 %v960
        %v1028 = vpop.f32.mrb[0].mxu0
        %v1029 = vadd.f32 0.0, %v1028
        %v1030 = vpop.f32.mrb[0].mxu0
        %1031 = vdwg.mxu0
        %v1032 = vadd.f32 %v594, %v1029
        %v1033 = vmax.f32 %v1032, 0.0
        %1034 = vst [vmem:[#allocation2 + $0x28] sm:$0xff] %v1033
        %1035 = vmatprep.subr.mxu0 0.0
        %1036 = vmatpush1.msra.mxu0 %v355
        %1037 = vmatprep.subr.mxu0 0.0
        %1038 = vmatpush1.msra.mxu0 %v356
        %1039 = vmatprep.subr.mxu0 0.0
        %1040 = vmatpush1.msra.mxu0 %v357
        %1041 = vmatprep.subr.mxu0 0.0
        %1042 = vmatpush1.msra.mxu0 %v358
        %1043 = vmatprep.subr.mxu0 0.0
        %1044 = vmatpush1.msra.mxu0 %v359
        %1045 = vmatprep.subr.mxu0 0.0
        %1046 = vmatpush1.msra.mxu0 %v360
        %1047 = vmatprep.subr.mxu0 0.0
        %1048 = vmatpush1.msra.mxu0 %v361
        %1049 = vmatprep.subr.mxu0 0.0
        %1050 = vmatpush1.msra.mxu0 %v362
        %1051 = vmatprep.subr.mxu0 0.0
        %1052 = vmatpush1.msra.mxu0 %v363
        %1053 = vmatprep.subr.mxu0 0.0
        %1054 = vmatpush1.msra.mxu0 %v364
        %1055 = vmatprep.subr.mxu0 0.0
        %1056 = vmatpush1.msra.mxu0 %v365
        %1057 = vmatprep.subr.mxu0 0.0
        %1058 = vmatpush1.msra.mxu0 %v366
        %1059 = vmatprep.subr.mxu0 0.0
        %1060 = vmatpush1.msra.mxu0 %v367
        %1061 = vmatprep.subr.mxu0 0.0
        %1062 = vmatpush1.msra.mxu0 %v368
        %1063 = vmatprep.subr.mxu0 0.0
        %1064 = vmatpush1.msra.mxu0 %v369
        %1065 = vmatprep.subr.mxu0 0.0
        %1066 = vmatpush1.msra.mxu0 %v370
        %1067 = vmatprep.subr.mxu0 0.0
        %1068 = vmatpush1.msra.mxu0 0.0
        %1069 = vmatprep.subr.mxu0 0.0
        %1070 = vmatpush1.msra.mxu0 0.0
        %1071 = vmatprep.subr.mxu0 0.0
        %1072 = vmatpush1.msra.mxu0 0.0
        %1073 = vmatprep.subr.mxu0 0.0
        %1074 = vmatpush1.msra.mxu0 0.0
        %1075 = vmatprep.subr.mxu0 0.0
        %1076 = vmatpush1.msra.mxu0 0.0
        %1077 = vmatprep.subr.mxu0 0.0
        %1078 = vmatpush1.msra.mxu0 0.0
        %1079 = vmatprep.subr.mxu0 0.0
        %1080 = vmatpush1.msra.mxu0 0.0
        %1081 = vmatprep.subr.mxu0 0.0
        %1082 = vmatpush1.msra.mxu0 0.0
        %1083 = vmatprep.subr.mxu0 0.0
        %1084 = vmatpush1.msra.mxu0 0.0
        %1085 = vmatprep.subr.mxu0 0.0
        %1086 = vmatpush1.msra.mxu0 0.0
        %1087 = vmatprep.subr.mxu0 0.0
        %1088 = vmatpush1.msra.mxu0 0.0
        %1089 = vmatprep.subr.mxu0 0.0
        %1090 = vmatpush1.msra.mxu0 0.0
        %1091 = vmatprep.subr.mxu0 0.0
        %1092 = vmatpush1.msra.mxu0 0.0
        %1093 = vmatprep.subr.mxu0 0.0
        %1094 = vmatpush1.msra.mxu0 0.0
        %1095 = vmatprep.subr.mxu0 0.0
        %1096 = vmatpush1.msra.mxu0 0.0
        %1097 = vmatprep.subr.mxu0 0.0
        %1098 = vmatpush1.msra.mxu0 0.0
        %1099 = vmatprep.mubr.f32.mxu0 0.0
        %1100 = vmatmul.mubr.f32.gmra.mrb[0].mxu0 %v1033
        %v1101 = vpop.f32.mrb[0].mxu0
        %v1102 = vadd.f32 0.0, %v1101
        %v1103 = vpop.f32.mrb[0].mxu0
        %1104 = vdwg.mxu0
        %v1105 = vadd.f32 %v595, %v1102
        %v1106 = vmax.f32 %v1105, 0.0
        %1107 = vst [vmem:[#allocation2 + $0x30] sm:$0xff] %v1106
        %1108 = vmatprep.subr.mxu0 0.0
        %1109 = vmatpush1.msra.mxu0 %v355
        %1110 = vmatprep.subr.mxu0 0.0
        %1111 = vmatpush1.msra.mxu0 %v356
        %1112 = vmatprep.subr.mxu0 0.0
        %1113 = vmatpush1.msra.mxu0 %v357
        %1114 = vmatprep.subr.mxu0 0.0
        %1115 = vmatpush1.msra.mxu0 %v358
        %1116 = vmatprep.subr.mxu0 0.0
        %1117 = vmatpush1.msra.mxu0 %v359
        %1118 = vmatprep.subr.mxu0 0.0
        %1119 = vmatpush1.msra.mxu0 %v360
        %1120 = vmatprep.subr.mxu0 0.0
        %1121 = vmatpush1.msra.mxu0 %v361
        %1122 = vmatprep.subr.mxu0 0.0
        %1123 = vmatpush1.msra.mxu0 %v362
        %1124 = vmatprep.subr.mxu0 0.0
        %1125 = vmatpush1.msra.mxu0 %v363
        %1126 = vmatprep.subr.mxu0 0.0
        %1127 = vmatpush1.msra.mxu0 %v364
        %1128 = vmatprep.subr.mxu0 0.0
        %1129 = vmatpush1.msra.mxu0 %v365
        %1130 = vmatprep.subr.mxu0 0.0
        %1131 = vmatpush1.msra.mxu0 %v366
        %1132 = vmatprep.subr.mxu0 0.0
        %1133 = vmatpush1.msra.mxu0 %v367
        %1134 = vmatprep.subr.mxu0 0.0
        %1135 = vmatpush1.msra.mxu0 %v368
        %1136 = vmatprep.subr.mxu0 0.0
        %1137 = vmatpush1.msra.mxu0 %v369
        %1138 = vmatprep.subr.mxu0 0.0
        %1139 = vmatpush1.msra.mxu0 %v370
        %1140 = vmatprep.subr.mxu0 0.0
        %1141 = vmatpush1.msra.mxu0 0.0
        %1142 = vmatprep.subr.mxu0 0.0
        %1143 = vmatpush1.msra.mxu0 0.0
        %1144 = vmatprep.subr.mxu0 0.0
        %1145 = vmatpush1.msra.mxu0 0.0
        %1146 = vmatprep.subr.mxu0 0.0
        %1147 = vmatpush1.msra.mxu0 0.0
        %1148 = vmatprep.subr.mxu0 0.0
        %1149 = vmatpush1.msra.mxu0 0.0
        %1150 = vmatprep.subr.mxu0 0.0
        %1151 = vmatpush1.msra.mxu0 0.0
        %1152 = vmatprep.subr.mxu0 0.0
        %1153 = vmatpush1.msra.mxu0 0.0
        %1154 = vmatprep.subr.mxu0 0.0
        %1155 = vmatpush1.msra.mxu0 0.0
        %1156 = vmatprep.subr.mxu0 0.0
        %1157 = vmatpush1.msra.mxu0 0.0
        %1158 = vmatprep.subr.mxu0 0.0
        %1159 = vmatpush1.msra.mxu0 0.0
        %1160 = vmatprep.subr.mxu0 0.0
        %1161 = vmatpush1.msra.mxu0 0.0
        %1162 = vmatprep.subr.mxu0 0.0
        %1163 = vmatpush1.msra.mxu0 0.0
        %1164 = vmatprep.subr.mxu0 0.0
        %1165 = vmatpush1.msra.mxu0 0.0
        %1166 = vmatprep.subr.mxu0 0.0
        %1167 = vmatpush1.msra.mxu0 0.0
        %1168 = vmatprep.subr.mxu0 0.0
        %1169 = vmatpush1.msra.mxu0 0.0
        %1170 = vmatprep.subr.mxu0 0.0
        %1171 = vmatpush1.msra.mxu0 0.0
        %1172 = vmatprep.mubr.f32.mxu0 0.0
        %1173 = vmatmul.mubr.f32.gmra.mrb[0].mxu0 %v1106
        %v1174 = vpop.f32.mrb[0].mxu0
        %v1175 = vadd.f32 0.0, %v1174
        %v1176 = vpop.f32.mrb[0].mxu0
        %1177 = vdwg.mxu0
        %v1178 = vadd.f32 %v596, %v1175
        %v1179 = vmax.f32 %v1178, 0.0
        %1180 = vst [vmem:[#allocation2 + $0x38] sm:$0xff] %v1179
        %p1181 = scmp.eq.s32.totalorder %s23, 2
        // Predicated region
        $region69: #{tpu_custom_call.1} parent=43 // pred_check
          %p1182 = pneg %p1181
        $region70: #{tpu_custom_call.1} parent=43 // pred_check_branch
          %1184 = sbr.rel (%p1182) target = $region72
        $region71: #{tpu_custom_call.1} parent=43 // pred_region
          %v1185 = vld [vmem:[#allocation2] sm:$0xff]
          %v1186 = vld [vmem:[#allocation2 + $0x8] sm:$0xff]
          %v1187 = vld [vmem:[#allocation2 + $0x10] sm:$0xff]
          %v1188 = vld [vmem:[#allocation2 + $0x18] sm:$0xff]
          %v1189 = vld [vmem:[#allocation2 + $0x20] sm:$0xff]
          %v1190 = vld [vmem:[#allocation2 + $0x28] sm:$0xff]
          %v1191 = vld [vmem:[#allocation2 + $0x30] sm:$0xff]
          %v1192 = vld [vmem:[#allocation2 + $0x38] sm:$0xff]
          %v1193 = vld [vmem:[#allocation9] sm:$0xff]
          %v1194 = vld [vmem:[#allocation9 + $0x8] sm:$0xff]
          %v1195 = vld [vmem:[#allocation9 + $0x10] sm:$0xff]
          %v1196 = vld [vmem:[#allocation9 + $0x18] sm:$0xff]
          %v1197 = vld [vmem:[#allocation9 + $0x20] sm:$0xff]
          %v1198 = vld [vmem:[#allocation9 + $0x28] sm:$0xff]
          %v1199 = vld [vmem:[#allocation9 + $0x30] sm:$0xff]
          %v1200 = vld [vmem:[#allocation9 + $0x38] sm:$0xff]
          %v1201 = vld [vmem:[#allocation9 + $0x40] sm:$0xff]
          %v1202 = vld [vmem:[#allocation9 + $0x48] sm:$0xff]
          %v1203 = vld [vmem:[#allocation9 + $0x50] sm:$0xff]
          %v1204 = vld [vmem:[#allocation9 + $0x58] sm:$0xff]
          %v1205 = vld [vmem:[#allocation9 + $0x60] sm:$0xff]
          %v1206 = vld [vmem:[#allocation9 + $0x68] sm:$0xff]
          %v1207 = vld [vmem:[#allocation9 + $0x70] sm:$0xff]
          %v1208 = vld [vmem:[#allocation9 + $0x78] sm:$0xff]
          %v1209 = vld [vmem:[%s5] sm:$0x1]
          %v1211 = vlaneseq
          %v1212 = vshrl.u32 %v1211, 7
          %v1213 = vsub.s32 0, %v1212
          %v1214 = vrot.slane %v1209, %v1213
          %1216 = vmatprep.subr.mxu0 0.0
          %1217 = vmatpush1.msra.mxu0 %v1193
          %1218 = vmatprep.subr.mxu0 0.0
          %1219 = vmatpush1.msra.mxu0 %v1194
          %1220 = vmatprep.subr.mxu0 0.0
          %1221 = vmatpush1.msra.mxu0 %v1195
          %1222 = vmatprep.subr.mxu0 0.0
          %1223 = vmatpush1.msra.mxu0 %v1196
          %1224 = vmatprep.subr.mxu0 0.0
          %1225 = vmatpush1.msra.mxu0 %v1197
          %1226 = vmatprep.subr.mxu0 0.0
          %1227 = vmatpush1.msra.mxu0 %v1198
          %1228 = vmatprep.subr.mxu0 0.0
          %1229 = vmatpush1.msra.mxu0 %v1199
          %1230 = vmatprep.subr.mxu0 0.0
          %1231 = vmatpush1.msra.mxu0 %v1200
          %1232 = vmatprep.subr.mxu0 0.0
          %1233 = vmatpush1.msra.mxu0 %v1201
          %1234 = vmatprep.subr.mxu0 0.0
          %1235 = vmatpush1.msra.mxu0 %v1202
          %1236 = vmatprep.subr.mxu0 0.0
          %1237 = vmatpush1.msra.mxu0 %v1203
          %1238 = vmatprep.subr.mxu0 0.0
          %1239 = vmatpush1.msra.mxu0 %v1204
          %1240 = vmatprep.subr.mxu0 0.0
          %1241 = vmatpush1.msra.mxu0 %v1205
          %1242 = vmatprep.subr.mxu0 0.0
          %1243 = vmatpush1.msra.mxu0 %v1206
          %1244 = vmatprep.subr.mxu0 0.0
          %1245 = vmatpush1.msra.mxu0 %v1207
          %1246 = vmatprep.subr.mxu0 0.0
          %1247 = vmatpush1.msra.mxu0 %v1208
          %1248 = vmatprep.subr.mxu0 0.0
          %1249 = vmatpush1.msra.mxu0 0.0
          %1250 = vmatprep.subr.mxu0 0.0
          %1251 = vmatpush1.msra.mxu0 0.0
          %1252 = vmatprep.subr.mxu0 0.0
          %1253 = vmatpush1.msra.mxu0 0.0
          %1254 = vmatprep.subr.mxu0 0.0
          %1255 = vmatpush1.msra.mxu0 0.0
          %1256 = vmatprep.subr.mxu0 0.0
          %1257 = vmatpush1.msra.mxu0 0.0
          %1258 = vmatprep.subr.mxu0 0.0
          %1259 = vmatpush1.msra.mxu0 0.0
          %1260 = vmatprep.subr.mxu0 0.0
          %1261 = vmatpush1.msra.mxu0 0.0
          %1262 = vmatprep.subr.mxu0 0.0
          %1263 = vmatpush1.msra.mxu0 0.0
          %1264 = vmatprep.subr.mxu0 0.0
          %1265 = vmatpush1.msra.mxu0 0.0
          %1266 = vmatprep.subr.mxu0 0.0
          %1267 = vmatpush1.msra.mxu0 0.0
          %1268 = vmatprep.subr.mxu0 0.0
          %1269 = vmatpush1.msra.mxu0 0.0
          %1270 = vmatprep.subr.mxu0 0.0
          %1271 = vmatpush1.msra.mxu0 0.0
          %1272 = vmatprep.subr.mxu0 0.0
          %1273 = vmatpush1.msra.mxu0 0.0
          %1274 = vmatprep.subr.mxu0 0.0
          %1275 = vmatpush1.msra.mxu0 0.0
          %1276 = vmatprep.subr.mxu0 0.0
          %1277 = vmatpush1.msra.mxu0 0.0
          %1278 = vmatprep.subr.mxu0 0.0
          %1279 = vmatpush1.msra.mxu0 0.0
          %1280 = vmatprep.mubr.f32.mxu0 0.0
          %1281 = vmatmul.mubr.f32.gmra.mrb[0].mxu0 %v1185
          %v1282 = vpop.f32.mrb[0].mxu0
          %v1283 = vadd.f32 %v1214, %v1282
          %v1284 = vpop.f32.mrb[0].mxu0
          %1285 = vmatprep.mubr.f32.mxu0 0.0
          %1286 = vmatmul.mubr.f32.gmra.mrb[0].mxu0 %v1186
          %v1287 = vpop.f32.mrb[0].mxu0
          %v1288 = vadd.f32 %v1214, %v1287
          %v1289 = vpop.f32.mrb[0].mxu0
          %1290 = vmatprep.mubr.f32.mxu0 0.0
          %1291 = vmatmul.mubr.f32.gmra.mrb[0].mxu0 %v1187
          %v1292 = vpop.f32.mrb[0].mxu0
          %v1293 = vadd.f32 %v1214, %v1292
          %v1294 = vpop.f32.mrb[0].mxu0
          %1295 = vmatprep.mubr.f32.mxu0 0.0
          %1296 = vmatmul.mubr.f32.gmra.mrb[0].mxu0 %v1188
          %v1297 = vpop.f32.mrb[0].mxu0
          %v1298 = vadd.f32 %v1214, %v1297
          %v1299 = vpop.f32.mrb[0].mxu0
          %1300 = vmatprep.mubr.f32.mxu0 0.0
          %1301 = vmatmul.mubr.f32.gmra.mrb[0].mxu0 %v1189
          %v1302 = vpop.f32.mrb[0].mxu0
          %v1303 = vadd.f32 %v1214, %v1302
          %v1304 = vpop.f32.mrb[0].mxu0
          %1305 = vmatprep.mubr.f32.mxu0 0.0
          %1306 = vmatmul.mubr.f32.gmra.mrb[0].mxu0 %v1190
          %v1307 = vpop.f32.mrb[0].mxu0
          %v1308 = vadd.f32 %v1214, %v1307
          %v1309 = vpop.f32.mrb[0].mxu0
          %1310 = vmatprep.mubr.f32.mxu0 0.0
          %1311 = vmatmul.mubr.f32.gmra.mrb[0].mxu0 %v1191
          %v1312 = vpop.f32.mrb[0].mxu0
          %v1313 = vadd.f32 %v1214, %v1312
          %v1314 = vpop.f32.mrb[0].mxu0
          %1315 = vmatprep.mubr.f32.mxu0 0.0
          %1316 = vmatmul.mubr.f32.gmra.mrb[0].mxu0 %v1192
          %v1317 = vpop.f32.mrb[0].mxu0
          %v1318 = vadd.f32 %v1214, %v1317
          %v1319 = vpop.f32.mrb[0].mxu0
          %1320 = vdwg.mxu0
          %1321 = vst [vmem:[#allocation11] sm:$0xff] %v1283
          %1322 = vst [vmem:[#allocation11 + $0x8] sm:$0xff] %v1288
          %1323 = vst [vmem:[#allocation11 + $0x10] sm:$0xff] %v1293
          %1324 = vst [vmem:[#allocation11 + $0x18] sm:$0xff] %v1298
          %1325 = vst [vmem:[#allocation11 + $0x20] sm:$0xff] %v1303
          %1326 = vst [vmem:[#allocation11 + $0x28] sm:$0xff] %v1308
          %1327 = vst [vmem:[#allocation11 + $0x30] sm:$0xff] %v1313
          %1328 = vst [vmem:[#allocation11 + $0x38] sm:$0xff] %v1318
        $region72: #{tpu_custom_call.1} parent=43 // pred_fallthru
          _
        // Predicated region
        $region73: #{tpu_custom_call.1} parent=43 // pred_check
          %p1329 = pneg %p177
        $region74: #{tpu_custom_call.1} parent=43 // pred_check_branch
          %1331 = sbr.rel (%p1329) target = $region76
        $region75: #{tpu_custom_call.1} parent=43 // pred_region
          %s1333 = ssub.s32 1024, 1024
          %1334 = vsyncadd [#allocation5], %s1333
          %s1335 = sshll.u32 [#allocation11], 4
          %s1336 = int_to_ptr.vmem [resolvable:$true] %s1335
          %1341 = dma.vmem_to_hbm [thread:$0]  %s1336, 1024, %s6, [#allocation5], 128, 128, 8
        $region76: #{tpu_custom_call.1} parent=43 // pred_fallthru
          _
        // Predicated region
        $region77: #{tpu_custom_call.1} parent=43 // pred_check
          %p1342 = pneg %p177
        $region78: #{tpu_custom_call.1} parent=43 // pred_check_branch
          %1344 = sbr.rel (%p1342) target = $region80
        $region79: #{tpu_custom_call.1} parent=43 // pred_region
          %1345 = dma.done [#allocation5], 1024
        $region80: #{tpu_custom_call.1} parent=43 // pred_fallthru
          _
      $region44: #{tpu_custom_call.1} parent=5 // pred_fallthru
        _
      %p1346 = scmp.le.s32.totalorder 2, %s18
      // Predicated region
      $region81: #{tpu_custom_call.1} parent=5 // pred_check
        %p1347 = pneg %p1346
      $region82: #{tpu_custom_call.1} parent=5 // pred_check_branch
        %1349 = sbr.rel (%p1347) target = $region84
      $region83: #{tpu_custom_call.1} parent=5 // pred_region
        %s1350 = ssub.s32 %s18, 2
      $region84: #{tpu_custom_call.1} parent=5 // pred_fallthru
        _
    $region6: #{tpu_custom_call.1} parent=1 // loop_footer
      %s22 = sadd.s32 1, %s18
    $region7: #{tpu_custom_call.1} parent=1 // loop_footer_branch
      %17 = sbr.rel target = $region3
    $region8: #{tpu_custom_call.1} parent=1 // loop_exit
      _
    %1351 = vsyncpa [#allocation4], 1
    %s1352 = scalar_lea.sflag [#allocation4], 1
    %1353 = vsyncpa %s1352, 1
    %1354 = vsyncpa [#allocation7], 1
    %s1355 = scalar_lea.sflag [#allocation7], 1
    %1356 = vsyncpa %s1355, 1
    %1357 = vsyncpa [#allocation10], 1
    %1358 = vsyncpa [#allocation5], 1
    %s1359 = scalar_lea.sflag [#allocation5], 1
    %1360 = vsyncpa %s1359, 1

</llo_original>
